<compile_context>
chip_gen: v7x
topology: tpu7x:2x2x1
jax: 0.10.0
libtpu: 0.0.40
codegen_flags: <defaults>
</compile_context>

<pallas_src>
import functools
import math

import jax
import jax.numpy as jnp
from jax.experimental import pallas as pl
from jax.experimental.pallas import tpu as pltpu


def _mha_kernel(q_ref, k_ref, v_ref,
                wq_ref, wk_ref, wv_ref, wo_ref,
                bq_ref, bk_ref, bv_ref, bo_ref,
                o_ref,
                kh_cache, vh_cache,
                *, num_heads: int, d_k: int, compute_dtype):
    H = num_heads
    cdt = compute_dtype

    # ---- K/V projections: once per batch (q-tile axis is "arbitrary"), cached per head. ----
    @pl.when(pl.program_id(1) == 0)
    def _():
        k_proj = jnp.dot(k_ref[0], wk_ref[...],
                         preferred_element_type=jnp.float32) + bk_ref[...]      # (S, D) f32
        v_proj = jnp.dot(v_ref[0], wv_ref[...],
                         preferred_element_type=jnp.float32) + bv_ref[...]      # (S, D) f32
        for h in range(H):
            sl = slice(h * d_k, (h + 1) * d_k)
            kh_cache[h] = k_proj[:, sl].astype(cdt)                             # (S, d_k)
            vh_cache[h] = v_proj[:, sl].astype(cdt)

    # ---- Q projection: one lane-dense (tq, D)@(D, D) matmul; 1/sqrt(d_k) folded into wq/bq. ----
    q_proj = jnp.dot(q_ref[0], wq_ref[...],
                     preferred_element_type=jnp.float32) + bq_ref[...]          # (tq, D) f32
    qh = jnp.stack([q_proj[:, h * d_k:(h + 1) * d_k] for h in range(H)],
                   axis=0).astype(cdt)                                          # (H, tq, d_k)

    # ---- Scaled dot-product attention, all heads batched on the leading axis. ----
    scores = jnp.einsum("hqd,hkd->hqk", qh, kh_cache[...],
                        preferred_element_type=jnp.float32)                     # (H, tq, S) f32
    m = jnp.max(scores, axis=-1, keepdims=True)
    p = jnp.exp(scores - m)                                                     # f32 softmax numerator
    l = jnp.sum(p, axis=-1, keepdims=True)
    ctx = jnp.einsum("hqk,hkd->hqd", p.astype(cdt), vh_cache[...],
                     preferred_element_type=jnp.float32)                        # (H, tq, d_k) f32
    ctx = ctx * pl.reciprocal(l, approx=True)                                   # normalize after PV (EUP)

    # ---- combine_heads + W_o as one dense (tq, D)@(D, D) matmul (concat never hits HBM). ----
    ctx_m = jnp.concatenate([ctx[h] for h in range(H)], axis=-1).astype(cdt)    # (tq, D)
    out = jnp.dot(ctx_m, wo_ref[...],
                  preferred_element_type=jnp.float32) + bo_ref[...]             # (tq, D) f32
    o_ref[0] = out.astype(o_ref.dtype)


def _vmem_capacity_bytes() -> int:
    """Physical VMEM per TensorCore; conservative fallback if the query is unavailable."""
    try:
        return int(pltpu.get_tpu_info().vmem_capacity_bytes)
    except Exception:
        return 64 * 1024 * 1024            # v7x-conservative default


def _vmem_budget_bytes(S, tq, D, H, d_k, act_bytes, out_bytes):
    """Rough upper bound on the kernel's VMEM working set."""
    io = 2 * (tq * D * act_bytes           # q tile (double-buffered)
              + 2 * S * D * act_bytes      # k, v blocks (re-DMA'd only per batch)
              + tq * D * out_bytes)        # output tile
    w = 2 * (4 * D * D * act_bytes + 4 * D * 4)          # weights + biases (2 buffers)
    cache = 2 * S * D * act_bytes                        # kh/vh scratch (single copy)
    interm = (2 * S * D * 4                              # k/v projections in f32 at fill time
              + tq * D * (4 + act_bytes)                 # q_proj f32 + qh
              + 2 * H * tq * S * 4                       # scores + probs f32
              + tq * D * 4                               # ctx f32
              + tq * D * (act_bytes + 4))                # merged ctx + out
    return io + w + cache + interm


def _pick_q_tile(S, D, H, d_k, act_bytes, out_bytes, scoped_cap):
    """Largest q-tile (multiple of 16, bf16 packing) that divides S and fits the VMEM budget."""
    max_tile = 512 if scoped_cap >= 90 * 1024 * 1024 else 256   # bigger tiles on 128 MiB parts
    if S <= max_tile:
        return S
    for t in (512, 384, 256, 128, 64, 32, 16):
        if t > max_tile or S % t != 0:
            continue
        if _vmem_budget_bytes(S, t, D, H, d_k, act_bytes, out_bytes) <= int(0.8 * scoped_cap):
            return t
    return S  # no suitable divisor: fall back to a single full-S tile


def multihead_attention(q, k, v, params, *, num_heads: int,
                        compute_dtype=jnp.bfloat16, q_tile=None):
    """q, k, v: [B, S, D]. params: PyTorch-layout weights (w_*: [out,in] = [D,D], b_*: [D])."""
    B, S, D = q.shape
    assert D % num_heads == 0
    d_k = D // num_heads
    out_dtype = q.dtype

    act_bytes = jnp.dtype(compute_dtype).itemsize
    out_bytes = jnp.dtype(out_dtype).itemsize

    capacity = _vmem_capacity_bytes()
    scoped_cap = int(capacity * 0.75)      # leave headroom for Mosaic internal scratch

    tq = q_tile if q_tile is not None else _pick_q_tile(S, D, num_heads, d_k,
                                                        act_bytes, out_bytes, scoped_cap)
    assert S % tq == 0
    n_q = S // tq

    # PyTorch Linear computes y = x @ W.T + b.  Keep W.T dense (D, D); fold 1/sqrt(d_k) into Q.
    inv_scale = 1.0 / math.sqrt(d_k)
    wq_r = (params["w_q"].T * inv_scale).astype(compute_dtype)
    wk_r = params["w_k"].T.astype(compute_dtype)
    wv_r = params["w_v"].T.astype(compute_dtype)
    wo_r = params["w_o"].T.astype(compute_dtype)

    bq_r = (params["b_q"] * inv_scale).reshape(1, D).astype(jnp.float32)
    bk_r = params["b_k"].reshape(1, D).astype(jnp.float32)
    bv_r = params["b_v"].reshape(1, D).astype(jnp.float32)
    bo_r = params["b_o"].reshape(1, D).astype(jnp.float32)

    # Feed activations in compute dtype (halves HBM->VMEM traffic for bf16).
    qc = q.astype(compute_dtype)
    kc = k.astype(compute_dtype)
    vc = v.astype(compute_dtype)

    q_spec = pl.BlockSpec((1, tq, D), lambda b, i: (b, i, 0))
    kv_spec = pl.BlockSpec((1, S, D), lambda b, i: (b, 0, 0))     # re-DMA'd only when b changes
    w_spec = pl.BlockSpec((D, D), lambda b, i: (0, 0))            # DMA'd once for the whole kernel
    b_spec = pl.BlockSpec((1, D), lambda b, i: (0, 0))
    out_spec = pl.BlockSpec((1, tq, D), lambda b, i: (b, i, 0))

    budget = _vmem_budget_bytes(S, tq, D, num_heads, d_k, act_bytes, out_bytes)
    vmem_limit = int(min(max(2 * budget, 32 * 1024 * 1024), scoped_cap))

    kernel = functools.partial(_mha_kernel, num_heads=num_heads, d_k=d_k,
                               compute_dtype=compute_dtype)

    return pl.pallas_call(
        kernel,
        out_shape=jax.ShapeDtypeStruct((B, S, D), out_dtype),
        grid_spec=pltpu.PrefetchScalarGridSpec(
            num_scalar_prefetch=0,
            grid=(B, n_q),
            in_specs=[q_spec, kv_spec, kv_spec,
                      w_spec, w_spec, w_spec, w_spec,
                      b_spec, b_spec, b_spec, b_spec],
            out_specs=out_spec,
            scratch_shapes=[pltpu.VMEM((num_heads, S, d_k), compute_dtype),   # kh cache
                            pltpu.VMEM((num_heads, S, d_k), compute_dtype)],  # vh cache
        ),
        compiler_params=pltpu.CompilerParams(
            # q-tile axis must be "arbitrary": the per-batch K/V cache is filled at i == 0.
            dimension_semantics=("parallel", "arbitrary"),
            vmem_limit_bytes=vmem_limit),
    )(qc, kc, vc, wq_r, wk_r, wv_r, wo_r, bq_r, bk_r, bv_r, bo_r)


def _reference_mha(q, k, v, params, *, num_heads: int):
    """Plain-JAX f32 reference mirroring the PyTorch module."""
    B, S, D = q.shape
    d_k = D // num_heads

    def lin(x, w, b):
        return x @ w.T + b

    def split(x):
        return x.reshape(B, S, num_heads, d_k).transpose(0, 2, 1, 3)  # (B, H, S, d_k)

    qh = split(lin(q, params["w_q"], params["b_q"]))
    kh = split(lin(k, params["w_k"], params["b_k"]))
    vh = split(lin(v, params["w_v"], params["b_v"]))

    scores = jnp.einsum("bhqd,bhkd->bhqk", qh, kh) / math.sqrt(d_k)
    probs = jax.nn.softmax(scores, axis=-1)
    out = jnp.einsum("bhqk,bhkd->bhqd", probs, vh)
    out = out.transpose(0, 2, 1, 3).reshape(B, S, D)
    return lin(out, params["w_o"], params["b_o"])


def init_params(key, d_model):
    """Deterministic init matching PyTorch nn.Linear default (uniform +-1/sqrt(fan_in))."""
    bound = 1.0 / math.sqrt(d_model)
    keys = jax.random.split(key, 8)
    u = lambda k, shape: jax.random.uniform(k, shape, jnp.float32, -bound, bound)
    return {
        "w_q": u(keys[0], (d_model, d_model)), "b_q": u(keys[1], (d_model,)),
        "w_k": u(keys[2], (d_model, d_model)), "b_k": u(keys[3], (d_model,)),
        "w_v": u(keys[4], (d_model, d_model)), "b_v": u(keys[5], (d_model,)),
        "w_o": u(keys[6], (d_model, d_model)), "b_o": u(keys[7], (d_model,)),
    }


if __name__ == "__main__":
    B, S, D, H = 2, 8, 32, 4

    root = jax.random.PRNGKey(0)
    kp, kq, kk, kv = jax.random.split(root, 4)
    params = init_params(kp, D)

    q = jax.random.normal(kq, (B, S, D), jnp.float32)
    k = jax.random.normal(kk, (B, S, D), jnp.float32)
    v = jax.random.normal(kv, (B, S, D), jnp.float32)

    out = multihead_attention(q, k, v, params, num_heads=H)
    out = jax.block_until_ready(out)

    ref = _reference_mha(q, k, v, params, num_heads=H)
    assert out.shape == (B, S, D)
    assert out.dtype == q.dtype
    # bf16 matmul operands (f32 accumulation) vs the f32 reference -> loosened tolerance.
    assert jnp.allclose(out, ref, atol=2e-2, rtol=2e-2), "mismatch vs reference"

    print("KERNEL_OK")
</pallas_src>

<mosaic_0001>
module attributes {stable_mosaic.version = 11 : i64} {
  func.func @_mha_kernel(%arg0: i32, %arg1: i32, %arg2: memref<1x8x32xbf16, #tpu.memory_space<vmem>>, %arg3: memref<1x8x32xbf16, #tpu.memory_space<vmem>>, %arg4: memref<1x8x32xbf16, #tpu.memory_space<vmem>>, %arg5: memref<32x32xbf16, #tpu.memory_space<vmem>>, %arg6: memref<32x32xbf16, #tpu.memory_space<vmem>>, %arg7: memref<32x32xbf16, #tpu.memory_space<vmem>>, %arg8: memref<32x32xbf16, #tpu.memory_space<vmem>>, %arg9: memref<1x32xf32, #tpu.memory_space<vmem>>, %arg10: memref<1x32xf32, #tpu.memory_space<vmem>>, %arg11: memref<1x32xf32, #tpu.memory_space<vmem>>, %arg12: memref<1x32xf32, #tpu.memory_space<vmem>>, %arg13: memref<1x8x32xf32, #tpu.memory_space<vmem>>, %arg14: memref<4x8x8xbf16, #tpu.memory_space<vmem>>, %arg15: memref<4x8x8xbf16, #tpu.memory_space<vmem>>) attributes {dimension_semantics = [#tpu.dimension_semantics<parallel>, #tpu.dimension_semantics<arbitrary>], iteration_bounds = array<i64: 2, 1>, scalar_prefetch = 0 : i64, scratch_operands = 2 : i64, tpu.core_type = #tpu.core_type<tc>, window_params = [{transform_indices = @transform_0, window_bounds = array<i64: 1, 8, 32>}, {transform_indices = @transform_1, window_bounds = array<i64: 1, 8, 32>}, {transform_indices = @transform_2, window_bounds = array<i64: 1, 8, 32>}, {pipeline_mode = #tpu.pipeline_mode<synchronous>, transform_indices = @transform_3, window_bounds = array<i64: 32, 32>}, {pipeline_mode = #tpu.pipeline_mode<synchronous>, transform_indices = @transform_4, window_bounds = array<i64: 32, 32>}, {pipeline_mode = #tpu.pipeline_mode<synchronous>, transform_indices = @transform_5, window_bounds = array<i64: 32, 32>}, {pipeline_mode = #tpu.pipeline_mode<synchronous>, transform_indices = @transform_6, window_bounds = array<i64: 32, 32>}, {pipeline_mode = #tpu.pipeline_mode<synchronous>, transform_indices = @transform_7, window_bounds = array<i64: 1, 32>}, {pipeline_mode = #tpu.pipeline_mode<synchronous>, transform_indices = @transform_8, window_bounds = array<i64: 1, 32>}, {pipeline_mode = #tpu.pipeline_mode<synchronous>, transform_indices = @transform_9, window_bounds = array<i64: 1, 32>}, {pipeline_mode = #tpu.pipeline_mode<synchronous>, transform_indices = @transform_10, window_bounds = array<i64: 1, 32>}, {transform_indices = @transform_11, window_bounds = array<i64: 1, 8, 32>}]} {
    %c0_i32 = arith.constant 0 : i32
    %0 = arith.cmpi eq, %arg1, %c0_i32 : i32
    %1 = arith.extui %0 : i1 to i32
    %c0_i32_0 = arith.constant 0 : i32
    %2 = arith.cmpi ne, %1, %c0_i32_0 : i32
    scf.if %2 {
      %c0_25 = arith.constant 0 : index
      %c0_26 = arith.constant 0 : index
      %c0_27 = arith.constant 0 : index
      %53 = vector.load %arg3[%c0_25, %c0_26, %c0_27] : memref<1x8x32xbf16, #tpu.memory_space<vmem>>, vector<1x8x32xbf16>
      %54 = vector.shape_cast %53 : vector<1x8x32xbf16> to vector<8x32xbf16>
      %c0_28 = arith.constant 0 : index
      %c0_29 = arith.constant 0 : index
      %55 = vector.load %arg6[%c0_28, %c0_29] : memref<32x32xbf16, #tpu.memory_space<vmem>>, vector<32x32xbf16>
      %cst_30 = arith.constant dense<0.000000e+00> : vector<8x32xf32>
      %56 = tpu.matmul %54, %55, %cst_30 {dimension_numbers = #tpu.dot_dimension_numbers<[1], [0], [0], [1], [0, 0, 1, 1], [], []>} : vector<8x32xbf16>, vector<32x32xbf16>, vector<8x32xf32> -> vector<8x32xf32>
      %c0_31 = arith.constant 0 : index
      %c0_32 = arith.constant 0 : index
      %57 = vector.load %arg10[%c0_31, %c0_32] : memref<1x32xf32, #tpu.memory_space<vmem>>, vector<1x32xf32>
      %58 = vector.broadcast %57 : vector<1x32xf32> to vector<8x32xf32>
      %59 = arith.addf %56, %58 : vector<8x32xf32>
      %c0_33 = arith.constant 0 : index
      %c0_34 = arith.constant 0 : index
      %c0_35 = arith.constant 0 : index
      %60 = vector.load %arg4[%c0_33, %c0_34, %c0_35] : memref<1x8x32xbf16, #tpu.memory_space<vmem>>, vector<1x8x32xbf16>
      %61 = vector.shape_cast %60 : vector<1x8x32xbf16> to vector<8x32xbf16>
      %c0_36 = arith.constant 0 : index
      %c0_37 = arith.constant 0 : index
      %62 = vector.load %arg7[%c0_36, %c0_37] : memref<32x32xbf16, #tpu.memory_space<vmem>>, vector<32x32xbf16>
      %cst_38 = arith.constant dense<0.000000e+00> : vector<8x32xf32>
      %63 = tpu.matmul %61, %62, %cst_38 {dimension_numbers = #tpu.dot_dimension_numbers<[1], [0], [0], [1], [0, 0, 1, 1], [], []>} : vector<8x32xbf16>, vector<32x32xbf16>, vector<8x32xf32> -> vector<8x32xf32>
      %c0_39 = arith.constant 0 : index
      %c0_40 = arith.constant 0 : index
      %64 = vector.load %arg11[%c0_39, %c0_40] : memref<1x32xf32, #tpu.memory_space<vmem>>, vector<1x32xf32>
      %65 = vector.broadcast %64 : vector<1x32xf32> to vector<8x32xf32>
      %66 = arith.addf %63, %65 : vector<8x32xf32>
      %67 = vector.extract_strided_slice %59 {offsets = [0, 0], sizes = [8, 8], strides = [1, 1]} : vector<8x32xf32> to vector<8x8xf32>
      %68 = arith.truncf %67 : vector<8x8xf32> to vector<8x8xbf16>
      %c0_41 = arith.constant 0 : index
      %c0_42 = arith.constant 0 : index
      %c0_43 = arith.constant 0 : index
      %69 = vector.load %arg14[%c0_41, %c0_42, %c0_43] : memref<4x8x8xbf16, #tpu.memory_space<vmem>>, vector<1x8x8xbf16>
      %70 = vector.shape_cast %69 : vector<1x8x8xbf16> to vector<8x8xbf16>
      %71 = vector.shape_cast %68 : vector<8x8xbf16> to vector<1x8x8xbf16>
      tpu.vector_store %arg14[%c0_41, %c0_42, %c0_43], %71 {strides = array<i32>} : memref<4x8x8xbf16, #tpu.memory_space<vmem>>, vector<1x8x8xbf16>,
      %72 = vector.extract_strided_slice %66 {offsets = [0, 0], sizes = [8, 8], strides = [1, 1]} : vector<8x32xf32> to vector<8x8xf32>
      %73 = arith.truncf %72 : vector<8x8xf32> to vector<8x8xbf16>
      %c0_44 = arith.constant 0 : index
      %c0_45 = arith.constant 0 : index
      %c0_46 = arith.constant 0 : index
      %74 = vector.load %arg15[%c0_44, %c0_45, %c0_46] : memref<4x8x8xbf16, #tpu.memory_space<vmem>>, vector<1x8x8xbf16>
      %75 = vector.shape_cast %74 : vector<1x8x8xbf16> to vector<8x8xbf16>
      %76 = vector.shape_cast %73 : vector<8x8xbf16> to vector<1x8x8xbf16>
      tpu.vector_store %arg15[%c0_44, %c0_45, %c0_46], %76 {strides = array<i32>} : memref<4x8x8xbf16, #tpu.memory_space<vmem>>, vector<1x8x8xbf16>,
      %77 = vector.extract_strided_slice %59 {offsets = [0, 8], sizes = [8, 8], strides = [1, 1]} : vector<8x32xf32> to vector<8x8xf32>
      %78 = arith.truncf %77 : vector<8x8xf32> to vector<8x8xbf16>
      %c1 = arith.constant 1 : index
      %c0_47 = arith.constant 0 : index
      %c0_48 = arith.constant 0 : index
      %79 = vector.load %arg14[%c1, %c0_47, %c0_48] : memref<4x8x8xbf16, #tpu.memory_space<vmem>>, vector<1x8x8xbf16>
      %80 = vector.shape_cast %79 : vector<1x8x8xbf16> to vector<8x8xbf16>
      %81 = vector.shape_cast %78 : vector<8x8xbf16> to vector<1x8x8xbf16>
      tpu.vector_store %arg14[%c1, %c0_47, %c0_48], %81 {strides = array<i32>} : memref<4x8x8xbf16, #tpu.memory_space<vmem>>, vector<1x8x8xbf16>,
      %82 = vector.extract_strided_slice %66 {offsets = [0, 8], sizes = [8, 8], strides = [1, 1]} : vector<8x32xf32> to vector<8x8xf32>
      %83 = arith.truncf %82 : vector<8x8xf32> to vector<8x8xbf16>
      %c1_49 = arith.constant 1 : index
      %c0_50 = arith.constant 0 : index
      %c0_51 = arith.constant 0 : index
      %84 = vector.load %arg15[%c1_49, %c0_50, %c0_51] : memref<4x8x8xbf16, #tpu.memory_space<vmem>>, vector<1x8x8xbf16>
      %85 = vector.shape_cast %84 : vector<1x8x8xbf16> to vector<8x8xbf16>
      %86 = vector.shape_cast %83 : vector<8x8xbf16> to vector<1x8x8xbf16>
      tpu.vector_store %arg15[%c1_49, %c0_50, %c0_51], %86 {strides = array<i32>} : memref<4x8x8xbf16, #tpu.memory_space<vmem>>, vector<1x8x8xbf16>,
      %87 = vector.extract_strided_slice %59 {offsets = [0, 16], sizes = [8, 8], strides = [1, 1]} : vector<8x32xf32> to vector<8x8xf32>
      %88 = arith.truncf %87 : vector<8x8xf32> to vector<8x8xbf16>
      %c2 = arith.constant 2 : index
      %c0_52 = arith.constant 0 : index
      %c0_53 = arith.constant 0 : index
      %89 = vector.load %arg14[%c2, %c0_52, %c0_53] : memref<4x8x8xbf16, #tpu.memory_space<vmem>>, vector<1x8x8xbf16>
      %90 = vector.shape_cast %89 : vector<1x8x8xbf16> to vector<8x8xbf16>
      %91 = vector.shape_cast %88 : vector<8x8xbf16> to vector<1x8x8xbf16>
      tpu.vector_store %arg14[%c2, %c0_52, %c0_53], %91 {strides = array<i32>} : memref<4x8x8xbf16, #tpu.memory_space<vmem>>, vector<1x8x8xbf16>,
      %92 = vector.extract_strided_slice %66 {offsets = [0, 16], sizes = [8, 8], strides = [1, 1]} : vector<8x32xf32> to vector<8x8xf32>
      %93 = arith.truncf %92 : vector<8x8xf32> to vector<8x8xbf16>
      %c2_54 = arith.constant 2 : index
      %c0_55 = arith.constant 0 : index
      %c0_56 = arith.constant 0 : index
      %94 = vector.load %arg15[%c2_54, %c0_55, %c0_56] : memref<4x8x8xbf16, #tpu.memory_space<vmem>>, vector<1x8x8xbf16>
      %95 = vector.shape_cast %94 : vector<1x8x8xbf16> to vector<8x8xbf16>
      %96 = vector.shape_cast %93 : vector<8x8xbf16> to vector<1x8x8xbf16>
      tpu.vector_store %arg15[%c2_54, %c0_55, %c0_56], %96 {strides = array<i32>} : memref<4x8x8xbf16, #tpu.memory_space<vmem>>, vector<1x8x8xbf16>,
      %97 = vector.extract_strided_slice %59 {offsets = [0, 24], sizes = [8, 8], strides = [1, 1]} : vector<8x32xf32> to vector<8x8xf32>
      %98 = arith.truncf %97 : vector<8x8xf32> to vector<8x8xbf16>
      %c3 = arith.constant 3 : index
      %c0_57 = arith.constant 0 : index
      %c0_58 = arith.constant 0 : index
      %99 = vector.load %arg14[%c3, %c0_57, %c0_58] : memref<4x8x8xbf16, #tpu.memory_space<vmem>>, vector<1x8x8xbf16>
      %100 = vector.shape_cast %99 : vector<1x8x8xbf16> to vector<8x8xbf16>
      %101 = vector.shape_cast %98 : vector<8x8xbf16> to vector<1x8x8xbf16>
      tpu.vector_store %arg14[%c3, %c0_57, %c0_58], %101 {strides = array<i32>} : memref<4x8x8xbf16, #tpu.memory_space<vmem>>, vector<1x8x8xbf16>,
      %102 = vector.extract_strided_slice %66 {offsets = [0, 24], sizes = [8, 8], strides = [1, 1]} : vector<8x32xf32> to vector<8x8xf32>
      %103 = arith.truncf %102 : vector<8x8xf32> to vector<8x8xbf16>
      %c3_59 = arith.constant 3 : index
      %c0_60 = arith.constant 0 : index
      %c0_61 = arith.constant 0 : index
      %104 = vector.load %arg15[%c3_59, %c0_60, %c0_61] : memref<4x8x8xbf16, #tpu.memory_space<vmem>>, vector<1x8x8xbf16>
      %105 = vector.shape_cast %104 : vector<1x8x8xbf16> to vector<8x8xbf16>
      %106 = vector.shape_cast %103 : vector<8x8xbf16> to vector<1x8x8xbf16>
      tpu.vector_store %arg15[%c3_59, %c0_60, %c0_61], %106 {strides = array<i32>} : memref<4x8x8xbf16, #tpu.memory_space<vmem>>, vector<1x8x8xbf16>,
    } else {
    }
    %c0 = arith.constant 0 : index
    %c0_1 = arith.constant 0 : index
    %c0_2 = arith.constant 0 : index
    %3 = vector.load %arg2[%c0, %c0_1, %c0_2] : memref<1x8x32xbf16, #tpu.memory_space<vmem>>, vector<1x8x32xbf16>
    %4 = vector.shape_cast %3 : vector<1x8x32xbf16> to vector<8x32xbf16>
    %c0_3 = arith.constant 0 : index
    %c0_4 = arith.constant 0 : index
    %5 = vector.load %arg5[%c0_3, %c0_4] : memref<32x32xbf16, #tpu.memory_space<vmem>>, vector<32x32xbf16>
    %cst = arith.constant dense<0.000000e+00> : vector<8x32xf32>
    %6 = tpu.matmul %4, %5, %cst {dimension_numbers = #tpu.dot_dimension_numbers<[1], [0], [0], [1], [0, 0, 1, 1], [], []>} : vector<8x32xbf16>, vector<32x32xbf16>, vector<8x32xf32> -> vector<8x32xf32>
    %c0_5 = arith.constant 0 : index
    %c0_6 = arith.constant 0 : index
    %7 = vector.load %arg9[%c0_5, %c0_6] : memref<1x32xf32, #tpu.memory_space<vmem>>, vector<1x32xf32>
    %8 = vector.broadcast %7 : vector<1x32xf32> to vector<8x32xf32>
    %9 = arith.addf %6, %8 : vector<8x32xf32>
    %10 = vector.extract_strided_slice %9 {offsets = [0, 0], sizes = [8, 8], strides = [1, 1]} : vector<8x32xf32> to vector<8x8xf32>
    %11 = vector.extract_strided_slice %9 {offsets = [0, 8], sizes = [8, 8], strides = [1, 1]} : vector<8x32xf32> to vector<8x8xf32>
    %12 = vector.extract_strided_slice %9 {offsets = [0, 16], sizes = [8, 8], strides = [1, 1]} : vector<8x32xf32> to vector<8x8xf32>
    %13 = vector.extract_strided_slice %9 {offsets = [0, 24], sizes = [8, 8], strides = [1, 1]} : vector<8x32xf32> to vector<8x8xf32>
    %14 = vector.shape_cast %10 : vector<8x8xf32> to vector<1x8x8xf32>
    %15 = vector.shape_cast %11 : vector<8x8xf32> to vector<1x8x8xf32>
    %16 = vector.shape_cast %12 : vector<8x8xf32> to vector<1x8x8xf32>
    %17 = vector.shape_cast %13 : vector<8x8xf32> to vector<1x8x8xf32>
    %18 = tpu.concatenate %14, %15, %16, %17 in 0 : vector<1x8x8xf32>, vector<1x8x8xf32>, vector<1x8x8xf32>, vector<1x8x8xf32> -> vector<4x8x8xf32>
    %19 = arith.truncf %18 : vector<4x8x8xf32> to vector<4x8x8xbf16>
    %c0_7 = arith.constant 0 : index
    %c0_8 = arith.constant 0 : index
    %c0_9 = arith.constant 0 : index
    %20 = vector.load %arg14[%c0_7, %c0_8, %c0_9] : memref<4x8x8xbf16, #tpu.memory_space<vmem>>, vector<4x8x8xbf16>
    "tpu.trace_start"() <{level = 10 : i32, message = "hqd,hkd->hqk"}> : () -> ()
    %cst_10 = arith.constant dense<0.000000e+00> : vector<4x8x8xf32>
    %21 = tpu.matmul %19, %20, %cst_10 {dimension_numbers = #tpu.dot_dimension_numbers<[2], [2], [1], [1], [0, 0, 0, 1, 1, 1], [0], [0]>} : vector<4x8x8xbf16>, vector<4x8x8xbf16>, vector<4x8x8xf32> -> vector<4x8x8xf32>
    "tpu.trace_stop"() : () -> ()
    %cst_11 = arith.constant dense<0xFF800000> : vector<4x8xf32>
    %22 = vector.multi_reduction <maximumf>, %21, %cst_11 [2] : vector<4x8x8xf32> to vector<4x8xf32>
    %23 = vector.shape_cast %22 : vector<4x8xf32> to vector<4x8x1xf32>
    %24 = vector.broadcast %23 : vector<4x8x1xf32> to vector<4x8x8xf32>
    %25 = arith.subf %21, %24 : vector<4x8x8xf32>
    %26 = math.exp %25 : vector<4x8x8xf32>
    %cst_12 = arith.constant dense<0.000000e+00> : vector<4x8xf32>
    %27 = vector.multi_reduction <add>, %26, %cst_12 [2] : vector<4x8x8xf32> to vector<4x8xf32>
    %28 = vector.shape_cast %27 : vector<4x8xf32> to vector<4x8x1xf32>
    %29 = arith.truncf %26 : vector<4x8x8xf32> to vector<4x8x8xbf16>
    %c0_13 = arith.constant 0 : index
    %c0_14 = arith.constant 0 : index
    %c0_15 = arith.constant 0 : index
    %30 = vector.load %arg15[%c0_13, %c0_14, %c0_15] : memref<4x8x8xbf16, #tpu.memory_space<vmem>>, vector<4x8x8xbf16>
    "tpu.trace_start"() <{level = 10 : i32, message = "hqk,hkd->hqd"}> : () -> ()
    %cst_16 = arith.constant dense<0.000000e+00> : vector<4x8x8xf32>
    %31 = tpu.matmul %29, %30, %cst_16 {dimension_numbers = #tpu.dot_dimension_numbers<[2], [1], [1], [2], [0, 0, 0, 1, 1, 2], [0], [0]>} : vector<4x8x8xbf16>, vector<4x8x8xbf16>, vector<4x8x8xf32> -> vector<4x8x8xf32>
    "tpu.trace_stop"() : () -> ()
    %32 = tpu.reciprocal %28 {approx = true} : vector<4x8x1xf32> -> vector<4x8x1xf32>
    %33 = vector.broadcast %32 : vector<4x8x1xf32> to vector<4x8x8xf32>
    %34 = arith.mulf %31, %33 : vector<4x8x8xf32>
    %35 = vector.extract_strided_slice %34 {offsets = [0, 0, 0], sizes = [1, 8, 8], strides = [1, 1, 1]} : vector<4x8x8xf32> to vector<1x8x8xf32>
    %36 = vector.shape_cast %35 : vector<1x8x8xf32> to vector<8x8xf32>
    %37 = vector.extract_strided_slice %34 {offsets = [1, 0, 0], sizes = [1, 8, 8], strides = [1, 1, 1]} : vector<4x8x8xf32> to vector<1x8x8xf32>
    %38 = vector.shape_cast %37 : vector<1x8x8xf32> to vector<8x8xf32>
    %39 = vector.extract_strided_slice %34 {offsets = [2, 0, 0], sizes = [1, 8, 8], strides = [1, 1, 1]} : vector<4x8x8xf32> to vector<1x8x8xf32>
    %40 = vector.shape_cast %39 : vector<1x8x8xf32> to vector<8x8xf32>
    %41 = vector.extract_strided_slice %34 {offsets = [3, 0, 0], sizes = [1, 8, 8], strides = [1, 1, 1]} : vector<4x8x8xf32> to vector<1x8x8xf32>
    %42 = vector.shape_cast %41 : vector<1x8x8xf32> to vector<8x8xf32>
    %43 = tpu.concatenate %36, %38, %40, %42 in 1 : vector<8x8xf32>, vector<8x8xf32>, vector<8x8xf32>, vector<8x8xf32> -> vector<8x32xf32>
    %44 = arith.truncf %43 : vector<8x32xf32> to vector<8x32xbf16>
    %c0_17 = arith.constant 0 : index
    %c0_18 = arith.constant 0 : index
    %45 = vector.load %arg8[%c0_17, %c0_18] : memref<32x32xbf16, #tpu.memory_space<vmem>>, vector<32x32xbf16>
    %cst_19 = arith.constant dense<0.000000e+00> : vector<8x32xf32>
    %46 = tpu.matmul %44, %45, %cst_19 {dimension_numbers = #tpu.dot_dimension_numbers<[1], [0], [0], [1], [0, 0, 1, 1], [], []>} : vector<8x32xbf16>, vector<32x32xbf16>, vector<8x32xf32> -> vector<8x32xf32>
    %c0_20 = arith.constant 0 : index
    %c0_21 = arith.constant 0 : index
    %47 = vector.load %arg12[%c0_20, %c0_21] : memref<1x32xf32, #tpu.memory_space<vmem>>, vector<1x32xf32>
    %48 = vector.broadcast %47 : vector<1x32xf32> to vector<8x32xf32>
    %49 = arith.addf %46, %48 : vector<8x32xf32>
    %c0_22 = arith.constant 0 : index
    %c0_23 = arith.constant 0 : index
    %c0_24 = arith.constant 0 : index
    %50 = vector.load %arg13[%c0_22, %c0_23, %c0_24] : memref<1x8x32xf32, #tpu.memory_space<vmem>>, vector<1x8x32xf32>
    %51 = vector.shape_cast %50 : vector<1x8x32xf32> to vector<8x32xf32>
    %52 = vector.shape_cast %49 : vector<8x32xf32> to vector<1x8x32xf32>
    tpu.vector_store %arg13[%c0_22, %c0_23, %c0_24], %52 {strides = array<i32>} : memref<1x8x32xf32, #tpu.memory_space<vmem>>, vector<1x8x32xf32>,
    return
  }
  func.func @transform_0(%arg0: i32, %arg1: i32) -> (i32, i32, i32) {
    %c0_i32 = arith.constant 0 : i32
    %c0_i32_0 = arith.constant 0 : i32
    return %arg0, %arg1, %c0_i32 : i32, i32, i32
  }
  func.func @transform_1(%arg0: i32, %arg1: i32) -> (i32, i32, i32) {
    %c0_i32 = arith.constant 0 : i32
    %c0_i32_0 = arith.constant 0 : i32
    %c0_i32_1 = arith.constant 0 : i32
    return %arg0, %c0_i32, %c0_i32_0 : i32, i32, i32
  }
  func.func @transform_2(%arg0: i32, %arg1: i32) -> (i32, i32, i32) {
    %c0_i32 = arith.constant 0 : i32
    %c0_i32_0 = arith.constant 0 : i32
    %c0_i32_1 = arith.constant 0 : i32
    return %arg0, %c0_i32, %c0_i32_0 : i32, i32, i32
  }
  func.func @transform_3(%arg0: i32, %arg1: i32) -> (i32, i32) {
    %c0_i32 = arith.constant 0 : i32
    %c0_i32_0 = arith.constant 0 : i32
    %c0_i32_1 = arith.constant 0 : i32
    return %c0_i32, %c0_i32_0 : i32, i32
  }
  func.func @transform_4(%arg0: i32, %arg1: i32) -> (i32, i32) {
    %c0_i32 = arith.constant 0 : i32
    %c0_i32_0 = arith.constant 0 : i32
    %c0_i32_1 = arith.constant 0 : i32
    return %c0_i32, %c0_i32_0 : i32, i32
  }
  func.func @transform_5(%arg0: i32, %arg1: i32) -> (i32, i32) {
    %c0_i32 = arith.constant 0 : i32
    %c0_i32_0 = arith.constant 0 : i32
    %c0_i32_1 = arith.constant 0 : i32
    return %c0_i32, %c0_i32_0 : i32, i32
  }
  func.func @transform_6(%arg0: i32, %arg1: i32) -> (i32, i32) {
    %c0_i32 = arith.constant 0 : i32
    %c0_i32_0 = arith.constant 0 : i32
    %c0_i32_1 = arith.constant 0 : i32
    return %c0_i32, %c0_i32_0 : i32, i32
  }
  func.func @transform_7(%arg0: i32, %arg1: i32) -> (i32, i32) {
    %c0_i32 = arith.constant 0 : i32
    %c0_i32_0 = arith.constant 0 : i32
    %c0_i32_1 = arith.constant 0 : i32
    return %c0_i32, %c0_i32_0 : i32, i32
  }
  func.func @transform_8(%arg0: i32, %arg1: i32) -> (i32, i32) {
    %c0_i32 = arith.constant 0 : i32
    %c0_i32_0 = arith.constant 0 : i32
    %c0_i32_1 = arith.constant 0 : i32
    return %c0_i32, %c0_i32_0 : i32, i32
  }
  func.func @transform_9(%arg0: i32, %arg1: i32) -> (i32, i32) {
    %c0_i32 = arith.constant 0 : i32
    %c0_i32_0 = arith.constant 0 : i32
    %c0_i32_1 = arith.constant 0 : i32
    return %c0_i32, %c0_i32_0 : i32, i32
  }
  func.func @transform_10(%arg0: i32, %arg1: i32) -> (i32, i32) {
    %c0_i32 = arith.constant 0 : i32
    %c0_i32_0 = arith.constant 0 : i32
    %c0_i32_1 = arith.constant 0 : i32
    return %c0_i32, %c0_i32_0 : i32, i32
  }
  func.func @transform_11(%arg0: i32, %arg1: i32) -> (i32, i32, i32) {
    %c0_i32 = arith.constant 0 : i32
    %c0_i32_0 = arith.constant 0 : i32
    return %arg0, %arg1, %c0_i32 : i32, i32, i32
  }
}

</mosaic_0001>

<llo_original>
// kernel: tpu_custom_call.1
$region0: #{tpu_custom_call.1}
  #allocation0 [shape = 'u32[]', space=smem, size = 0x4, offset = 0x4, fixed_abs, tag = 'smem constant byte address 0x4 - core index']
  #allocation1 [shape = 'u32[144,128]{1,0:T(1,128)}', space=vmem, size = 0x12000, scoped, tag = 'internal scratch']
  #allocation2 [shape = 'bf16[4,8,8]{2,1,0:T(8,128)(2,1)}', space=vmem, size = 0x2000, scoped, tag = 'scratch operand']
  #allocation3 [shape = 'bf16[4,8,8]{2,1,0:T(8,128)(2,1)}', space=vmem, size = 0x2000, scoped, tag = 'scratch operand']
  %s0 = inlined_call_operand.hbm [shape: bf16[2,8,32], index: 0, kind: input, shape index: {}]
  %s1 = inlined_call_operand.hbm [shape: bf16[2,8,32], index: 1, kind: input, shape index: {}]
  %s2 = inlined_call_operand.hbm [shape: bf16[2,8,32], index: 2, kind: input, shape index: {}]
  %s3 = inlined_call_operand.hbm [shape: bf16[32,32], index: 3, kind: input, shape index: {}]
  %s4 = inlined_call_operand.hbm [shape: bf16[32,32], index: 4, kind: input, shape index: {}]
  %s5 = inlined_call_operand.vmem [shape: bf16[32,32], index: 5, kind: input, shape index: {}]
  %s6 = inlined_call_operand.hbm [shape: bf16[32,32], index: 6, kind: input, shape index: {}]
  %s7 = inlined_call_operand.vmem [shape: f32[1,32], index: 7, kind: input, shape index: {}]
  %s8 = inlined_call_operand.vmem [shape: f32[1,32], index: 8, kind: input, shape index: {}]
  %s9 = inlined_call_operand.vmem [shape: f32[1,32], index: 9, kind: input, shape index: {}]
  %s10 = inlined_call_operand.vmem [shape: f32[1,32], index: 10, kind: input, shape index: {}]
  %s11 = inlined_call_operand.hbm [shape: f32[2,8,32], index: 11, kind: output, shape index: {}]
  %s12 = sld [smem:[#allocation0]]
  $region105: #{tpu_custom_call.1} parent=0
    _
  %s14 = ssub.s32 1, %s12
  %s15 = scalar_select 0, %s14, %s12
  $region1: #{tpu_custom_call.1} parent=0
    #allocation4 [shape = 'u8[4096]{0}', space=vmem, size = 0x1000, scoped, tag = 'input window, operand 0']
    #allocation5 [shape = 's32[2]{0}', space=sflag, size = 0x8, scoped, tag = 'scoped memory for tpu_custom_call.1']
    #allocation6 [shape = 's32[2]{0}', space=sflag, size = 0x8, scoped, tag = 'scoped memory for tpu_custom_call.1']
    #allocation7 [shape = 'u8[4096]{0}', space=vmem, size = 0x1000, scoped, tag = 'input window, operand 1']
    #allocation8 [shape = 's32[2]{0}', space=sflag, size = 0x8, scoped, tag = 'scoped memory for tpu_custom_call.1']
    #allocation9 [shape = 'u8[4096]{0}', space=vmem, size = 0x1000, scoped, tag = 'input window, operand 2']
    #allocation10 [shape = 'u8[8192]{0}', space=vmem, size = 0x2000, scoped, tag = 'input window, operand 3, single buffered']
    #allocation11 [shape = 's32[1]{0}', space=sflag, size = 0x4, scoped, tag = 'scoped memory for tpu_custom_call.1']
    #allocation12 [shape = 'u8[8192]{0}', space=vmem, size = 0x2000, scoped, tag = 'input window, operand 4, single buffered']
    #allocation13 [shape = 'u8[8192]{0}', space=vmem, size = 0x2000, scoped, tag = 'input window, operand 6, single buffered']
    #allocation14 [shape = 's32[1]{0}', space=sflag, size = 0x4, scoped, tag = 'scoped memory for tpu_custom_call.1']
    #allocation15 [shape = 'u8[8192]{0}', space=vmem, size = 0x2000, scoped, tag = 'output window, operand 0']
    %16 = vsyncpa [#allocation5], 0
    %s17 = scalar_lea.sflag [#allocation5], 1
    %18 = vsyncpa %s17, 0
    %19 = vsyncpa [#allocation8], 0
    %s20 = scalar_lea.sflag [#allocation8], 1
    %21 = vsyncpa %s20, 0
    %22 = vsyncpa [#allocation11], 0
    %23 = vsyncpa [#allocation14], 0
    %24 = vsyncpa [#allocation6], 0
    %s25 = scalar_lea.sflag [#allocation6], 1
    %26 = vsyncpa %s25, 0
    loop: start=0, step=1, limit=4
    $region2: #{tpu_custom_call.1} parent=1 // loop_pre_header
      _
    $region3: #{tpu_custom_call.1} parent=1 // loop_header
      %s28 = sphi 0, %s32
      %p29 = scmp.ge.s32.totalorder %s28, 4
      %s35 = sphi 0, %s47
      %s36 = sphi 0, %s43
      %s37 = sphi 0, %s35
      %s38 = sphi 0, %s36
      %s39 = sphi 0, %s37
      %s40 = sphi 0, %s38
      %s52 = sphi 0, %s54
      %s55 = sphi 0, %s52
      %s56 = sphi 0, %s55
      %s72 = sphi 0, %s56
      %s78 = sphi 0, %s80
      %s81 = sphi 0, %s78
      %s82 = sphi 0, %s81
      %s98 = sphi 0, %s82
      %s104 = sphi 0, %s106
      %s107 = sphi 0, %s104
      %s108 = sphi 0, %s107
      %s124 = sphi 0, %s108
      %s128 = sphi 0, %s128
      %s130 = sphi 0, %s128
      %s131 = sphi 0, %s130
      %s145 = sphi 0, %s131
      %s149 = sphi 0, %s149
      %s151 = sphi 0, %s149
      %s152 = sphi 0, %s151
      %s166 = sphi 0, %s152
      %s170 = sphi 0, %s170
      %s172 = sphi 0, %s170
      %s173 = sphi 0, %s172
      %s187 = sphi 0, %s173
      %s191 = sphi 0, %s191
      %s193 = sphi 0, %s191
      %s194 = sphi 0, %s193
      %s208 = sphi 0, %s194
      %s212 = sphi 0, %s212
      %s214 = sphi 0, %s212
      %s215 = sphi 0, %s214
      %s229 = sphi 0, %s215
      %s233 = sphi 0, %s233
      %s235 = sphi 0, %s233
      %s236 = sphi 0, %s235
      %s250 = sphi 0, %s236
      %s254 = sphi 0, %s254
      %s256 = sphi 0, %s254
      %s257 = sphi 0, %s256
      %s271 = sphi 0, %s257
      %s275 = sphi 0, %s275
      %s277 = sphi 0, %s275
      %s278 = sphi 0, %s277
      %s292 = sphi 0, %s278
      %s300 = sphi 0, %s302
      %s303 = sphi 0, %s300
      %s304 = sphi 0, %s303
      %s320 = sphi 0, %s304
    $region4: #{tpu_custom_call.1} parent=1 // loop_header_branch
      %31 = sbr.rel (%p29) target = $region8
    $region5: #{tpu_custom_call.1} parent=1 // loop_body
      %s33 = ssub.s32 %s28, 1
      %s34 = ssub.s32 %s28, 2
      %s41 = sadd.s32 1, %s36
      %p42 = scmp.ge.s32.totalorder %s41, 1
      %s43 = scalar_select %p42, 0, %s41
      %s44 = sadd.s32 1, %s35
      %s45 = scalar_select %p42, %s44, %s35
      %p46 = scmp.ge.s32.totalorder %s45, 2
      %s47 = scalar_select %p46, 0, %s45
      %s48 = ssub.s32 %s35, %s47
      %s49 = ssub.s32 %s36, %s43
      %s50 = sor.u32 %s48, %s49
      %p51 = scmp.eq.s32.totalorder %s50, 0
      %s53 = sadd.s32 %s52, 1
      %s54 = scalar_select %p51, %s52, %s53
      %p57 = pneg %p51
      %p58 = scmp.eq.s32.totalorder %s28, 1
      %p59 = por %p57, %p58
      %p60 = scmp.ne.s32.totalorder %s52, %s55
      %p61 = scmp.eq.s32.totalorder %s28, 0
      %p62 = por %p60, %p61
      %p63 = scmp.ne.s32.totalorder %s52, %s55
      %p64 = scmp.eq.s32.totalorder %s33, 1
      %p65 = por %p63, %p64
      %p66 = scmp.ne.s32.totalorder %s55, %s56
      %p67 = scmp.eq.s32.totalorder %s33, 0
      %p68 = por %p66, %p67
      %p69 = scmp.ne.s32.totalorder %s55, %s56
      %p70 = scmp.eq.s32.totalorder %s34, 1
      %p71 = por %p69, %p70
      %p73 = scmp.ne.s32.totalorder %s56, %s72
      %p74 = scmp.eq.s32.totalorder %s34, 0
      %p75 = por %p73, %p74
      %s76 = ssub.s32 %s35, %s47
      %p77 = scmp.eq.s32.totalorder %s76, 0
      %s79 = sadd.s32 %s78, 1
      %s80 = scalar_select %p77, %s78, %s79
      %p83 = pneg %p77
      %p84 = scmp.eq.s32.totalorder %s28, 1
      %p85 = por %p83, %p84
      %p86 = scmp.ne.s32.totalorder %s78, %s81
      %p87 = scmp.eq.s32.totalorder %s28, 0
      %p88 = por %p86, %p87
      %p89 = scmp.ne.s32.totalorder %s78, %s81
      %p90 = scmp.eq.s32.totalorder %s33, 1
      %p91 = por %p89, %p90
      %p92 = scmp.ne.s32.totalorder %s81, %s82
      %p93 = scmp.eq.s32.totalorder %s33, 0
      %p94 = por %p92, %p93
      %p95 = scmp.ne.s32.totalorder %s81, %s82
      %p96 = scmp.eq.s32.totalorder %s34, 1
      %p97 = por %p95, %p96
      %p99 = scmp.ne.s32.totalorder %s82, %s98
      %p100 = scmp.eq.s32.totalorder %s34, 0
      %p101 = por %p99, %p100
      %s102 = ssub.s32 %s35, %s47
      %p103 = scmp.eq.s32.totalorder %s102, 0
      %s105 = sadd.s32 %s104, 1
      %s106 = scalar_select %p103, %s104, %s105
      %p109 = pneg %p103
      %p110 = scmp.eq.s32.totalorder %s28, 1
      %p111 = por %p109, %p110
      %p112 = scmp.ne.s32.totalorder %s104, %s107
      %p113 = scmp.eq.s32.totalorder %s28, 0
      %p114 = por %p112, %p113
      %p115 = scmp.ne.s32.totalorder %s104, %s107
      %p116 = scmp.eq.s32.totalorder %s33, 1
      %p117 = por %p115, %p116
      %p118 = scmp.ne.s32.totalorder %s107, %s108
      %p119 = scmp.eq.s32.totalorder %s33, 0
      %p120 = por %p118, %p119
      %p121 = scmp.ne.s32.totalorder %s107, %s108
      %p122 = scmp.eq.s32.totalorder %s34, 1
      %p123 = por %p121, %p122
      %p125 = scmp.ne.s32.totalorder %s108, %s124
      %p126 = scmp.eq.s32.totalorder %s34, 0
      %p127 = por %p125, %p126
      %s129 = sadd.s32 %s128, 1
      %p132 = scmp.eq.s32.totalorder %s28, 1
      %p133 = scmp.ne.s32.totalorder %s128, %s130
      %p134 = scmp.eq.s32.totalorder %s28, 0
      %p135 = por %p133, %p134
      %p136 = scmp.ne.s32.totalorder %s128, %s130
      %p137 = scmp.eq.s32.totalorder %s33, 1
      %p138 = por %p136, %p137
      %p139 = scmp.ne.s32.totalorder %s130, %s131
      %p140 = scmp.eq.s32.totalorder %s33, 0
      %p141 = por %p139, %p140
      %p142 = scmp.ne.s32.totalorder %s130, %s131
      %p143 = scmp.eq.s32.totalorder %s34, 1
      %p144 = por %p142, %p143
      %p146 = scmp.ne.s32.totalorder %s131, %s145
      %p147 = scmp.eq.s32.totalorder %s34, 0
      %p148 = por %p146, %p147
      %s150 = sadd.s32 %s149, 1
      %p153 = scmp.eq.s32.totalorder %s28, 1
      %p154 = scmp.ne.s32.totalorder %s149, %s151
      %p155 = scmp.eq.s32.totalorder %s28, 0
      %p156 = por %p154, %p155
      %p157 = scmp.ne.s32.totalorder %s149, %s151
      %p158 = scmp.eq.s32.totalorder %s33, 1
      %p159 = por %p157, %p158
      %p160 = scmp.ne.s32.totalorder %s151, %s152
      %p161 = scmp.eq.s32.totalorder %s33, 0
      %p162 = por %p160, %p161
      %p163 = scmp.ne.s32.totalorder %s151, %s152
      %p164 = scmp.eq.s32.totalorder %s34, 1
      %p165 = por %p163, %p164
      %p167 = scmp.ne.s32.totalorder %s152, %s166
      %p168 = scmp.eq.s32.totalorder %s34, 0
      %p169 = por %p167, %p168
      %s171 = sadd.s32 %s170, 1
      %p174 = scmp.eq.s32.totalorder %s28, 1
      %p175 = scmp.ne.s32.totalorder %s170, %s172
      %p176 = scmp.eq.s32.totalorder %s28, 0
      %p177 = por %p175, %p176
      %p178 = scmp.ne.s32.totalorder %s170, %s172
      %p179 = scmp.eq.s32.totalorder %s33, 1
      %p180 = por %p178, %p179
      %p181 = scmp.ne.s32.totalorder %s172, %s173
      %p182 = scmp.eq.s32.totalorder %s33, 0
      %p183 = por %p181, %p182
      %p184 = scmp.ne.s32.totalorder %s172, %s173
      %p185 = scmp.eq.s32.totalorder %s34, 1
      %p186 = por %p184, %p185
      %p188 = scmp.ne.s32.totalorder %s173, %s187
      %p189 = scmp.eq.s32.totalorder %s34, 0
      %p190 = por %p188, %p189
      %s192 = sadd.s32 %s191, 1
      %p195 = scmp.eq.s32.totalorder %s28, 1
      %p196 = scmp.ne.s32.totalorder %s191, %s193
      %p197 = scmp.eq.s32.totalorder %s28, 0
      %p198 = por %p196, %p197
      %p199 = scmp.ne.s32.totalorder %s191, %s193
      %p200 = scmp.eq.s32.totalorder %s33, 1
      %p201 = por %p199, %p200
      %p202 = scmp.ne.s32.totalorder %s193, %s194
      %p203 = scmp.eq.s32.totalorder %s33, 0
      %p204 = por %p202, %p203
      %p205 = scmp.ne.s32.totalorder %s193, %s194
      %p206 = scmp.eq.s32.totalorder %s34, 1
      %p207 = por %p205, %p206
      %p209 = scmp.ne.s32.totalorder %s194, %s208
      %p210 = scmp.eq.s32.totalorder %s34, 0
      %p211 = por %p209, %p210
      %s213 = sadd.s32 %s212, 1
      %p216 = scmp.eq.s32.totalorder %s28, 1
      %p217 = scmp.ne.s32.totalorder %s212, %s214
      %p218 = scmp.eq.s32.totalorder %s28, 0
      %p219 = por %p217, %p218
      %p220 = scmp.ne.s32.totalorder %s212, %s214
      %p221 = scmp.eq.s32.totalorder %s33, 1
      %p222 = por %p220, %p221
      %p223 = scmp.ne.s32.totalorder %s214, %s215
      %p224 = scmp.eq.s32.totalorder %s33, 0
      %p225 = por %p223, %p224
      %p226 = scmp.ne.s32.totalorder %s214, %s215
      %p227 = scmp.eq.s32.totalorder %s34, 1
      %p228 = por %p226, %p227
      %p230 = scmp.ne.s32.totalorder %s215, %s229
      %p231 = scmp.eq.s32.totalorder %s34, 0
      %p232 = por %p230, %p231
      %s234 = sadd.s32 %s233, 1
      %p237 = scmp.eq.s32.totalorder %s28, 1
      %p238 = scmp.ne.s32.totalorder %s233, %s235
      %p239 = scmp.eq.s32.totalorder %s28, 0
      %p240 = por %p238, %p239
      %p241 = scmp.ne.s32.totalorder %s233, %s235
      %p242 = scmp.eq.s32.totalorder %s33, 1
      %p243 = por %p241, %p242
      %p244 = scmp.ne.s32.totalorder %s235, %s236
      %p245 = scmp.eq.s32.totalorder %s33, 0
      %p246 = por %p244, %p245
      %p247 = scmp.ne.s32.totalorder %s235, %s236
      %p248 = scmp.eq.s32.totalorder %s34, 1
      %p249 = por %p247, %p248
      %p251 = scmp.ne.s32.totalorder %s236, %s250
      %p252 = scmp.eq.s32.totalorder %s34, 0
      %p253 = por %p251, %p252
      %s255 = sadd.s32 %s254, 1
      %p258 = scmp.eq.s32.totalorder %s28, 1
      %p259 = scmp.ne.s32.totalorder %s254, %s256
      %p260 = scmp.eq.s32.totalorder %s28, 0
      %p261 = por %p259, %p260
      %p262 = scmp.ne.s32.totalorder %s254, %s256
      %p263 = scmp.eq.s32.totalorder %s33, 1
      %p264 = por %p262, %p263
      %p265 = scmp.ne.s32.totalorder %s256, %s257
      %p266 = scmp.eq.s32.totalorder %s33, 0
      %p267 = por %p265, %p266
      %p268 = scmp.ne.s32.totalorder %s256, %s257
      %p269 = scmp.eq.s32.totalorder %s34, 1
      %p270 = por %p268, %p269
      %p272 = scmp.ne.s32.totalorder %s257, %s271
      %p273 = scmp.eq.s32.totalorder %s34, 0
      %p274 = por %p272, %p273
      %s276 = sadd.s32 %s275, 1
      %p279 = scmp.eq.s32.totalorder %s28, 1
      %p280 = scmp.ne.s32.totalorder %s275, %s277
      %p281 = scmp.eq.s32.totalorder %s28, 0
      %p282 = por %p280, %p281
      %p283 = scmp.ne.s32.totalorder %s275, %s277
      %p284 = scmp.eq.s32.totalorder %s33, 1
      %p285 = por %p283, %p284
      %p286 = scmp.ne.s32.totalorder %s277, %s278
      %p287 = scmp.eq.s32.totalorder %s33, 0
      %p288 = por %p286, %p287
      %p289 = scmp.ne.s32.totalorder %s277, %s278
      %p290 = scmp.eq.s32.totalorder %s34, 1
      %p291 = por %p289, %p290
      %p293 = scmp.ne.s32.totalorder %s278, %s292
      %p294 = scmp.eq.s32.totalorder %s34, 0
      %p295 = por %p293, %p294
      %s296 = ssub.s32 %s35, %s47
      %s297 = ssub.s32 %s36, %s43
      %s298 = sor.u32 %s296, %s297
      %p299 = scmp.eq.s32.totalorder %s298, 0
      %s301 = sadd.s32 %s300, 1
      %s302 = scalar_select %p299, %s300, %s301
      %p305 = pneg %p299
      %p306 = scmp.eq.s32.totalorder %s28, 1
      %p307 = por %p305, %p306
      %p308 = scmp.ne.s32.totalorder %s300, %s303
      %p309 = scmp.eq.s32.totalorder %s28, 0
      %p310 = por %p308, %p309
      %p311 = scmp.ne.s32.totalorder %s300, %s303
      %p312 = scmp.eq.s32.totalorder %s33, 1
      %p313 = por %p311, %p312
      %p314 = scmp.ne.s32.totalorder %s303, %s304
      %p315 = scmp.eq.s32.totalorder %s33, 0
      %p316 = por %p314, %p315
      %p317 = scmp.ne.s32.totalorder %s303, %s304
      %p318 = scmp.eq.s32.totalorder %s34, 1
      %p319 = por %p317, %p318
      %p321 = scmp.ne.s32.totalorder %s304, %s320
      %p322 = scmp.eq.s32.totalorder %s34, 0
      %p323 = por %p321, %p322
      %p324 = scmp.le.s32.totalorder 1, %s28
      %p325 = scmp.lt.s32.totalorder %s28, 3
      %p326 = pnand %p324, %p325
      %p327 = pneg %p326
      // Predicated region
      $region9: #{tpu_custom_call.1} parent=5 // pred_check
        _
      $region10: #{tpu_custom_call.1} parent=5 // pred_check_branch
        %329 = sbr.rel (%p326) target = $region12
      $region11: #{tpu_custom_call.1} parent=5 // pred_region
        %s330 = ssub.s32 %s28, 1
        // Predicated region
        $region13: #{tpu_custom_call.1} parent=11 // pred_check
          %p331 = pneg %p141
        $region14: #{tpu_custom_call.1} parent=11 // pred_check_branch
          %333 = sbr.rel (%p331) target = $region16
        $region15: #{tpu_custom_call.1} parent=11 // pred_region
          %s335 = ssub.s32 256, 256
          %336 = vsyncadd [#allocation11], %s335
          %s337 = sshll.u32 [#allocation10], 4
          %s338 = int_to_ptr.vmem [resolvable:$true] %s337
          %343 = dma.hbm_to_vmem [thread:$0]  %s3, 256, %s338, [#allocation11], 64, 64, 4
        $region16: #{tpu_custom_call.1} parent=11 // pred_fallthru
          _
        // Predicated region
        $region17: #{tpu_custom_call.1} parent=11 // pred_check
          %p344 = pneg %p162
        $region18: #{tpu_custom_call.1} parent=11 // pred_check_branch
          %346 = sbr.rel (%p344) target = $region20
        $region19: #{tpu_custom_call.1} parent=11 // pred_region
          %s348 = ssub.s32 256, 256
          %349 = vsyncadd [#allocation11], %s348
          %s350 = sshll.u32 [#allocation12], 4
          %s351 = int_to_ptr.vmem [resolvable:$true] %s350
          %356 = dma.hbm_to_vmem [thread:$0]  %s4, 256, %s351, [#allocation11], 64, 64, 4
        $region20: #{tpu_custom_call.1} parent=11 // pred_fallthru
          _
        // Predicated region
        $region21: #{tpu_custom_call.1} parent=11 // pred_check
          %p357 = pneg %p183
        $region22: #{tpu_custom_call.1} parent=11 // pred_check_branch
          %359 = sbr.rel (%p357) target = $region24
        $region23: #{tpu_custom_call.1} parent=11 // pred_region
          _
        $region24: #{tpu_custom_call.1} parent=11 // pred_fallthru
          _
        // Predicated region
        $region25: #{tpu_custom_call.1} parent=11 // pred_check
          %p360 = pneg %p204
        $region26: #{tpu_custom_call.1} parent=11 // pred_check_branch
          %362 = sbr.rel (%p360) target = $region28
        $region27: #{tpu_custom_call.1} parent=11 // pred_region
          %s364 = ssub.s32 256, 256
          %365 = vsyncadd [#allocation14], %s364
          %s366 = sshll.u32 [#allocation13], 4
          %s367 = int_to_ptr.vmem [resolvable:$true] %s366
          %372 = dma.hbm_to_vmem [thread:$0]  %s6, 256, %s367, [#allocation14], 64, 64, 4
        $region28: #{tpu_custom_call.1} parent=11 // pred_fallthru
          _
        // Predicated region
        $region29: #{tpu_custom_call.1} parent=11 // pred_check
          %p373 = pneg %p225
        $region30: #{tpu_custom_call.1} parent=11 // pred_check_branch
          %375 = sbr.rel (%p373) target = $region32
        $region31: #{tpu_custom_call.1} parent=11 // pred_region
          _
        $region32: #{tpu_custom_call.1} parent=11 // pred_fallthru
          _
        // Predicated region
        $region33: #{tpu_custom_call.1} parent=11 // pred_check
          %p376 = pneg %p246
        $region34: #{tpu_custom_call.1} parent=11 // pred_check_branch
          %378 = sbr.rel (%p376) target = $region36
        $region35: #{tpu_custom_call.1} parent=11 // pred_region
          _
        $region36: #{tpu_custom_call.1} parent=11 // pred_fallthru
          _
        // Predicated region
        $region37: #{tpu_custom_call.1} parent=11 // pred_check
          %p379 = pneg %p267
        $region38: #{tpu_custom_call.1} parent=11 // pred_check_branch
          %381 = sbr.rel (%p379) target = $region40
        $region39: #{tpu_custom_call.1} parent=11 // pred_region
          _
        $region40: #{tpu_custom_call.1} parent=11 // pred_fallthru
          _
        // Predicated region
        $region41: #{tpu_custom_call.1} parent=11 // pred_check
          %p382 = pneg %p288
        $region42: #{tpu_custom_call.1} parent=11 // pred_check_branch
          %384 = sbr.rel (%p382) target = $region44
        $region43: #{tpu_custom_call.1} parent=11 // pred_region
          _
        $region44: #{tpu_custom_call.1} parent=11 // pred_fallthru
          _
      $region12: #{tpu_custom_call.1} parent=5 // pred_fallthru
        _
      %p385 = scmp.lt.s32.totalorder %s28, 2
      // Predicated region
      $region45: #{tpu_custom_call.1} parent=5 // pred_check
        %p386 = pneg %p385
      $region46: #{tpu_custom_call.1} parent=5 // pred_check_branch
        %388 = sbr.rel (%p386) target = $region48
      $region47: #{tpu_custom_call.1} parent=5 // pred_region
        // Predicated region
        $region49: #{tpu_custom_call.1} parent=47 // pred_check
          %p389 = pneg %p62
        $region50: #{tpu_custom_call.1} parent=47 // pred_check_branch
          %391 = sbr.rel (%p389) target = $region52
        $region51: #{tpu_custom_call.1} parent=47 // pred_region
          %s392 = sand.u32 %s52, 1
          %s393 = scalar_lea.sflag [#allocation5], %s392
          %s394 = sand.u32 %s52, 1
          %s395 = smul.addr %s394, 4
          %s396 = scalar_lea.vmem [#allocation4], %s395
          %s398 = ssub.s32 64, 64
          %399 = vsyncadd %s393, %s398
          %s400 = sadd.s32 %s36, %s35
          %s401 = smul.addr %s400, 64
          %s402 = scalar_lea.hbm %s0, %s401
          %s404 = sshll.u32 %s396, 4
          %s405 = int_to_ptr.vmem [resolvable:$true] %s404
          %407 = dma.hbm_to_vmem [thread:$0]  %s402, 64, %s405, %s393
        $region52: #{tpu_custom_call.1} parent=47 // pred_fallthru
          _
        // Predicated region
        $region53: #{tpu_custom_call.1} parent=47 // pred_check
          %p408 = pneg %p88
        $region54: #{tpu_custom_call.1} parent=47 // pred_check_branch
          %410 = sbr.rel (%p408) target = $region56
        $region55: #{tpu_custom_call.1} parent=47 // pred_region
          %s411 = sand.u32 %s28, 1
          %s412 = scalar_lea.sflag [#allocation8], %s411
          %s413 = sand.u32 %s78, 1
          %s414 = smul.addr %s413, 4
          %s415 = scalar_lea.vmem [#allocation7], %s414
          %s417 = ssub.s32 64, 64
          %418 = vsyncadd %s412, %s417
          %s419 = smul.addr %s35, 64
          %s420 = scalar_lea.hbm %s1, %s419
          %s422 = sshll.u32 %s415, 4
          %s423 = int_to_ptr.vmem [resolvable:$true] %s422
          %425 = dma.hbm_to_vmem [thread:$0]  %s420, 64, %s423, %s412
        $region56: #{tpu_custom_call.1} parent=47 // pred_fallthru
          _
        // Predicated region
        $region57: #{tpu_custom_call.1} parent=47 // pred_check
          %p426 = pneg %p114
        $region58: #{tpu_custom_call.1} parent=47 // pred_check_branch
          %428 = sbr.rel (%p426) target = $region60
        $region59: #{tpu_custom_call.1} parent=47 // pred_region
          %s429 = sand.u32 %s28, 1
          %s430 = scalar_lea.sflag [#allocation8], %s429
          %s431 = sand.u32 %s104, 1
          %s432 = smul.addr %s431, 4
          %s433 = scalar_lea.vmem [#allocation9], %s432
          %s435 = ssub.s32 64, 64
          %436 = vsyncadd %s430, %s435
          %s437 = smul.addr %s35, 64
          %s438 = scalar_lea.hbm %s2, %s437
          %s440 = sshll.u32 %s433, 4
          %s441 = int_to_ptr.vmem [resolvable:$true] %s440
          %443 = dma.hbm_to_vmem [thread:$0]  %s438, 64, %s441, %s430
        $region60: #{tpu_custom_call.1} parent=47 // pred_fallthru
          _
      $region48: #{tpu_custom_call.1} parent=5 // pred_fallthru
        _
      %p444 = scmp.le.s32.totalorder 1, %s28
      %p445 = scmp.lt.s32.totalorder %s28, 3
      %p446 = pnand %p444, %p445
      %p447 = pneg %p446
      // Predicated region
      $region61: #{tpu_custom_call.1} parent=5 // pred_check
        _
      $region62: #{tpu_custom_call.1} parent=5 // pred_check_branch
        %449 = sbr.rel (%p446) target = $region64
      $region63: #{tpu_custom_call.1} parent=5 // pred_region
        %s450 = ssub.s32 %s28, 1
        %s451 = sand.u32 %s55, 1
        %s452 = scalar_lea.sflag [#allocation5], %s451
        %s453 = sand.u32 %s55, 1
        %s454 = smul.addr %s453, 4
        %s455 = scalar_lea.vmem [#allocation4], %s454
        // Predicated region
        $region65: #{tpu_custom_call.1} parent=63 // pred_check
          %p456 = pneg %p68
        $region66: #{tpu_custom_call.1} parent=63 // pred_check_branch
          %458 = sbr.rel (%p456) target = $region68
        $region67: #{tpu_custom_call.1} parent=63 // pred_region
          %459 = dma.done %s452, 64
        $region68: #{tpu_custom_call.1} parent=63 // pred_fallthru
          _
        %s460 = sand.u32 %s33, 1
        %s461 = scalar_lea.sflag [#allocation8], %s460
        %s462 = sand.u32 %s81, 1
        %s463 = smul.addr %s462, 4
        %s464 = scalar_lea.vmem [#allocation7], %s463
        // Predicated region
        $region69: #{tpu_custom_call.1} parent=63 // pred_check
          %p465 = pneg %p94
        $region70: #{tpu_custom_call.1} parent=63 // pred_check_branch
          %467 = sbr.rel (%p465) target = $region72
        $region71: #{tpu_custom_call.1} parent=63 // pred_region
          %468 = dma.done %s461, 64
        $region72: #{tpu_custom_call.1} parent=63 // pred_fallthru
          _
        %s469 = sand.u32 %s33, 1
        %s470 = scalar_lea.sflag [#allocation8], %s469
        %s471 = sand.u32 %s107, 1
        %s472 = smul.addr %s471, 4
        %s473 = scalar_lea.vmem [#allocation9], %s472
        // Predicated region
        $region73: #{tpu_custom_call.1} parent=63 // pred_check
          %p474 = pneg %p120
        $region74: #{tpu_custom_call.1} parent=63 // pred_check_branch
          %476 = sbr.rel (%p474) target = $region76
        $region75: #{tpu_custom_call.1} parent=63 // pred_region
          %477 = dma.done %s470, 64
        $region76: #{tpu_custom_call.1} parent=63 // pred_fallthru
          _
        // Predicated region
        $region77: #{tpu_custom_call.1} parent=63 // pred_check
          %p478 = pneg %p141
        $region78: #{tpu_custom_call.1} parent=63 // pred_check_branch
          %480 = sbr.rel (%p478) target = $region80
        $region79: #{tpu_custom_call.1} parent=63 // pred_region
          %481 = dma.done [#allocation11], 256
        $region80: #{tpu_custom_call.1} parent=63 // pred_fallthru
          _
        // Predicated region
        $region81: #{tpu_custom_call.1} parent=63 // pred_check
          %p482 = pneg %p162
        $region82: #{tpu_custom_call.1} parent=63 // pred_check_branch
          %484 = sbr.rel (%p482) target = $region84
        $region83: #{tpu_custom_call.1} parent=63 // pred_region
          %485 = dma.done [#allocation11], 256
        $region84: #{tpu_custom_call.1} parent=63 // pred_fallthru
          _
        // Predicated region
        $region85: #{tpu_custom_call.1} parent=63 // pred_check
          %p486 = pneg %p204
        $region86: #{tpu_custom_call.1} parent=63 // pred_check_branch
          %488 = sbr.rel (%p486) target = $region88
        $region87: #{tpu_custom_call.1} parent=63 // pred_region
          %489 = dma.done [#allocation14], 256
        $region88: #{tpu_custom_call.1} parent=63 // pred_fallthru
          _
        %s490 = sand.u32 %s55, 1
        %s491 = scalar_lea.sflag [#allocation5], %s490
        %s492 = sand.u32 %s55, 1
        %s493 = smul.addr %s492, 4
        %s494 = scalar_lea.vmem [#allocation4], %s493
        %p495 = pneg %p68
        %p496 = pneg %p65
        %s497 = sand.u32 %s33, 1
        %s498 = scalar_lea.sflag [#allocation8], %s497
        %s499 = sand.u32 %s81, 1
        %s500 = smul.addr %s499, 4
        %s501 = scalar_lea.vmem [#allocation7], %s500
        %p502 = pneg %p94
        %p503 = pneg %p91
        %s504 = sand.u32 %s33, 1
        %s505 = scalar_lea.sflag [#allocation8], %s504
        %s506 = sand.u32 %s107, 1
        %s507 = smul.addr %s506, 4
        %s508 = scalar_lea.vmem [#allocation9], %s507
        %p509 = pneg %p120
        %p510 = pneg %p117
        %p511 = pneg %p141
        %p512 = pneg %p138
        %p513 = pneg %p162
        %p514 = pneg %p159
        %p515 = pneg %p183
        %p516 = pneg %p180
        %p517 = pneg %p204
        %p518 = pneg %p201
        %p519 = pneg %p225
        %p520 = pneg %p222
        %p521 = pneg %p246
        %p522 = pneg %p243
        %p523 = pneg %p267
        %p524 = pneg %p264
        %p525 = pneg %p288
        %p526 = pneg %p285
        %p527 = pneg %p316
        %p528 = pneg %p313
        %s529 = sand.u32 %s303, 1
        %s530 = scalar_lea.sflag [#allocation6], %s529
        %s531 = sand.u32 %s303, 1
        %s532 = smul.addr %s531, 8
        %s533 = scalar_lea.vmem [#allocation15], %s532
        %p535 = scmp.eq.s32.totalorder %s38, 0
        // Predicated region
        $region89: #{tpu_custom_call.1} parent=63 // pred_check
          %p536 = pneg %p535
        $region90: #{tpu_custom_call.1} parent=63 // pred_check_branch
          %538 = sbr.rel (%p536) target = $region92
        $region91: #{tpu_custom_call.1} parent=63 // pred_region
          %v539 = vld [vmem:[%s464] sm:$0xf]
          %v540 = vld [vmem:[#allocation12] sm:$0xf]
          %v541 = vld [vmem:[#allocation12 + $0x4] sm:$0xf]
          %v542 = vld [vmem:[#allocation12 + $0x8] sm:$0xf]
          %v543 = vld [vmem:[#allocation12 + $0xc] sm:$0xf]
          %v544 = vld [vmem:[%s8] sm:$0x1]
          %v546 = vlaneseq
          %v547 = vshrl.u32 %v546, 7
          %v548 = vsub.s32 0, %v547
          %v549 = vrot.slane %v544, %v548
          %v555 = vunpack.c.l.b16 %v540
          %v556 = vunpack.c.l.b16 %v541
          %v557 = vunpack.c.l.b16 %v542
          %v558 = vunpack.c.l.b16 %v543
          %v559 = vpack.c.b16 %v556, %v555
          %v560 = vpack.c.b16 %v558, %v557
          %vm563 = vcmask 261120
          %v565 = vsel %vm563, %v539, 0
          %567 = vmatprep.subr.bf16.mxu0 0
          %568 = vmatpush1.bf16.msra.mxu0 %v559
          %569 = vmatprep.subr.bf16.mxu0 0
          %570 = vmatpush1.bf16.msra.mxu0 %v560
          %571 = vmatprep.subr.bf16.mxu0 0
          %572 = vmatpush1.bf16.msra.mxu0 0
          %573 = vmatprep.subr.bf16.mxu0 0
          %574 = vmatpush1.bf16.msra.mxu0 0
          %575 = vmatprep.subr.bf16.mxu0 0
          %576 = vmatpush1.bf16.msra.mxu0 0
          %577 = vmatprep.subr.bf16.mxu0 0
          %578 = vmatpush1.bf16.msra.mxu0 0
          %579 = vmatprep.subr.bf16.mxu0 0
          %580 = vmatpush1.bf16.msra.mxu0 0
          %581 = vmatprep.subr.bf16.mxu0 0
          %582 = vmatpush1.bf16.msra.mxu0 0
          %583 = vmatprep.subr.bf16.mxu0 0
          %584 = vmatpush1.bf16.msra.mxu0 0
          %585 = vmatprep.subr.bf16.mxu0 0
          %586 = vmatpush1.bf16.msra.mxu0 0
          %587 = vmatprep.subr.bf16.mxu0 0
          %588 = vmatpush1.bf16.msra.mxu0 0
          %589 = vmatprep.subr.bf16.mxu0 0
          %590 = vmatpush1.bf16.msra.mxu0 0
          %591 = vmatprep.subr.bf16.mxu0 0
          %592 = vmatpush1.bf16.msra.mxu0 0
          %593 = vmatprep.subr.bf16.mxu0 0
          %594 = vmatpush1.bf16.msra.mxu0 0
          %595 = vmatprep.subr.bf16.mxu0 0
          %596 = vmatpush1.bf16.msra.mxu0 0
          %597 = vmatprep.subr.bf16.mxu0 0
          %598 = vmatpush1.bf16.msra.mxu0 0
          %599 = vmatprep.mubr.bf16.mxu0 0
          %600 = vmatmul.mubr.bf16.gmra.mrb[0].mxu0 %v565
          %v601 = vpop.f32.mrb[0].mxu0
          %v602 = vadd.f32 %v549, %v601
          %v603 = vpop.f32.mrb[0].mxu0
          %v604 = vpop.f32.mrb[0].mxu0
          %v605 = vpop.f32.mrb[0].mxu0
          %606 = vdwg.mxu0
          %v607 = vld [vmem:[%s473] sm:$0xf]
          %v608 = vld [vmem:[%s5] sm:$0xf]
          %v609 = vld [vmem:[%s5 + $0x4] sm:$0xf]
          %v610 = vld [vmem:[%s5 + $0x8] sm:$0xf]
          %v611 = vld [vmem:[%s5 + $0xc] sm:$0xf]
          %v612 = vld [vmem:[%s9] sm:$0x1]
          %v614 = vlaneseq
          %v615 = vshrl.u32 %v614, 7
          %v616 = vsub.s32 0, %v615
          %v617 = vrot.slane %v612, %v616
          %v623 = vunpack.c.l.b16 %v608
          %v624 = vunpack.c.l.b16 %v609
          %v625 = vunpack.c.l.b16 %v610
          %v626 = vunpack.c.l.b16 %v611
          %v627 = vpack.c.b16 %v624, %v623
          %v628 = vpack.c.b16 %v626, %v625
          %v632 = vsel %vm563, %v607, 0
          %634 = vmatprep.subr.bf16.mxu0 0
          %635 = vmatpush1.bf16.msra.mxu0 %v627
          %636 = vmatprep.subr.bf16.mxu0 0
          %637 = vmatpush1.bf16.msra.mxu0 %v628
          %638 = vmatprep.subr.bf16.mxu0 0
          %639 = vmatpush1.bf16.msra.mxu0 0
          %640 = vmatprep.subr.bf16.mxu0 0
          %641 = vmatpush1.bf16.msra.mxu0 0
          %642 = vmatprep.subr.bf16.mxu0 0
          %643 = vmatpush1.bf16.msra.mxu0 0
          %644 = vmatprep.subr.bf16.mxu0 0
          %645 = vmatpush1.bf16.msra.mxu0 0
          %646 = vmatprep.subr.bf16.mxu0 0
          %647 = vmatpush1.bf16.msra.mxu0 0
          %648 = vmatprep.subr.bf16.mxu0 0
          %649 = vmatpush1.bf16.msra.mxu0 0
          %650 = vmatprep.subr.bf16.mxu0 0
          %651 = vmatpush1.bf16.msra.mxu0 0
          %652 = vmatprep.subr.bf16.mxu0 0
          %653 = vmatpush1.bf16.msra.mxu0 0
          %654 = vmatprep.subr.bf16.mxu0 0
          %655 = vmatpush1.bf16.msra.mxu0 0
          %656 = vmatprep.subr.bf16.mxu0 0
          %657 = vmatpush1.bf16.msra.mxu0 0
          %658 = vmatprep.subr.bf16.mxu0 0
          %659 = vmatpush1.bf16.msra.mxu0 0
          %660 = vmatprep.subr.bf16.mxu0 0
          %661 = vmatpush1.bf16.msra.mxu0 0
          %662 = vmatprep.subr.bf16.mxu0 0
          %663 = vmatpush1.bf16.msra.mxu0 0
          %664 = vmatprep.subr.bf16.mxu0 0
          %665 = vmatpush1.bf16.msra.mxu0 0
          %666 = vmatprep.mubr.bf16.mxu0 0
          %667 = vmatmul.mubr.bf16.gmra.mrb[0].mxu0 %v632
          %v668 = vpop.f32.mrb[0].mxu0
          %v669 = vadd.f32 %v617, %v668
          %v670 = vpop.f32.mrb[0].mxu0
          %v671 = vpop.f32.mrb[0].mxu0
          %v672 = vpop.f32.mrb[0].mxu0
          %673 = vdwg.mxu0
          %v674 = vpack.c.bf16 %v602, %v602
          %vm675 = vcmask 60416
          %676 = vst.msk [vmem:[#allocation2] sm:$0xf] %vm675, %v674
          %v677 = vpack.c.bf16 %v669, %v669
          %678 = vst.msk [vmem:[#allocation3] sm:$0xf] %vm675, %v677
          %v680 = vunpack.c.l.b16 %v674
          %v681 = vpack.c.b16 %v680, %v680
          %682 = vrot.lane.b32.xlu0 %v681, 120
          %v683 = vpop.permute.xlu0 %682
          %s685 = scalar_lea.vmem [#allocation2], 4
          %686 = vst.msk [vmem:[%s685] sm:$0xf] %vm675, %v683
          %v688 = vunpack.c.l.b16 %v677
          %v689 = vpack.c.b16 %v688, %v688
          %690 = vrot.lane.b32.xlu0 %v689, 120
          %v691 = vpop.permute.xlu0 %690
          %s693 = scalar_lea.vmem [#allocation3], 4
          %694 = vst.msk [vmem:[%s693] sm:$0xf] %vm675, %v691
          %695 = vrot.lane.b32.xlu0 %v681, 112
          %v696 = vpop.permute.xlu0 %695
          %s698 = scalar_lea.vmem [#allocation2], 8
          %699 = vst.msk [vmem:[%s698] sm:$0xf] %vm675, %v696
          %700 = vrot.lane.b32.xlu0 %v689, 112
          %v701 = vpop.permute.xlu0 %700
          %s703 = scalar_lea.vmem [#allocation3], 8
          %704 = vst.msk [vmem:[%s703] sm:$0xf] %vm675, %v701
          %705 = vrot.lane.b32.xlu0 %v681, 104
          %v706 = vpop.permute.xlu0 %705
          %s708 = scalar_lea.vmem [#allocation2], 12
          %709 = vst.msk [vmem:[%s708] sm:$0xf] %vm675, %v706
          %710 = vrot.lane.b32.xlu0 %v689, 104
          %v711 = vpop.permute.xlu0 %710
          %s713 = scalar_lea.vmem [#allocation3], 12
          %714 = vst.msk [vmem:[%s713] sm:$0xf] %vm675, %v711
        $region92: #{tpu_custom_call.1} parent=63 // pred_fallthru
          _
        %v715 = vld [vmem:[%s455] sm:$0xf]
        %v716 = vld [vmem:[#allocation10] sm:$0xf]
        %v717 = vld [vmem:[#allocation10 + $0x4] sm:$0xf]
        %v718 = vld [vmem:[#allocation10 + $0x8] sm:$0xf]
        %v719 = vld [vmem:[#allocation10 + $0xc] sm:$0xf]
        %v720 = vld [vmem:[%s7] sm:$0x1]
        %v722 = vlaneseq
        %v723 = vshrl.u32 %v722, 7
        %v724 = vsub.s32 0, %v723
        %v725 = vrot.slane %v720, %v724
        %v731 = vunpack.c.l.b16 %v716
        %v732 = vunpack.c.l.b16 %v717
        %v733 = vunpack.c.l.b16 %v718
        %v734 = vunpack.c.l.b16 %v719
        %v735 = vpack.c.b16 %v732, %v731
        %v736 = vpack.c.b16 %v734, %v733
        %vm739 = vcmask 261120
        %v741 = vsel %vm739, %v715, 0
        %743 = vmatprep.subr.bf16.mxu0 0
        %744 = vmatpush1.bf16.msra.mxu0 %v735
        %745 = vmatprep.subr.bf16.mxu0 0
        %746 = vmatpush1.bf16.msra.mxu0 %v736
        %747 = vmatprep.subr.bf16.mxu0 0
        %748 = vmatpush1.bf16.msra.mxu0 0
        %749 = vmatprep.subr.bf16.mxu0 0
        %750 = vmatpush1.bf16.msra.mxu0 0
        %751 = vmatprep.subr.bf16.mxu0 0
        %752 = vmatpush1.bf16.msra.mxu0 0
        %753 = vmatprep.subr.bf16.mxu0 0
        %754 = vmatpush1.bf16.msra.mxu0 0
        %755 = vmatprep.subr.bf16.mxu0 0
        %756 = vmatpush1.bf16.msra.mxu0 0
        %757 = vmatprep.subr.bf16.mxu0 0
        %758 = vmatpush1.bf16.msra.mxu0 0
        %759 = vmatprep.subr.bf16.mxu0 0
        %760 = vmatpush1.bf16.msra.mxu0 0
        %761 = vmatprep.subr.bf16.mxu0 0
        %762 = vmatpush1.bf16.msra.mxu0 0
        %763 = vmatprep.subr.bf16.mxu0 0
        %764 = vmatpush1.bf16.msra.mxu0 0
        %765 = vmatprep.subr.bf16.mxu0 0
        %766 = vmatpush1.bf16.msra.mxu0 0
        %767 = vmatprep.subr.bf16.mxu0 0
        %768 = vmatpush1.bf16.msra.mxu0 0
        %769 = vmatprep.subr.bf16.mxu0 0
        %770 = vmatpush1.bf16.msra.mxu0 0
        %771 = vmatprep.subr.bf16.mxu0 0
        %772 = vmatpush1.bf16.msra.mxu0 0
        %773 = vmatprep.subr.bf16.mxu0 0
        %774 = vmatpush1.bf16.msra.mxu0 0
        %775 = vmatprep.mubr.bf16.mxu0 0
        %776 = vmatmul.mubr.bf16.gmra.mrb[0].mxu0 %v741
        %v777 = vpop.f32.mrb[0].mxu0
        %v778 = vadd.f32 %v725, %v777
        %v779 = vpop.f32.mrb[0].mxu0
        %v780 = vpop.f32.mrb[0].mxu0
        %v781 = vpop.f32.mrb[0].mxu0
        %782 = vdwg.mxu0
        %784 = vrot.lane.b32.xlu0 %v778, 120
        %v785 = vpop.permute.xlu0 %784
        %787 = vrot.lane.b32.xlu0 %v778, 112
        %v788 = vpop.permute.xlu0 %787
        %790 = vrot.lane.b32.xlu0 %v778, 104
        %v791 = vpop.permute.xlu0 %790
        %v793 = vpack.c.bf16 %v778, %v778
        %v794 = vpack.c.bf16 %v785, %v785
        %v795 = vpack.c.bf16 %v788, %v788
        %v796 = vpack.c.bf16 %v791, %v791
        %v797 = vld [vmem:[#allocation2] sm:$0xf]
        %v798 = vld [vmem:[#allocation2 + $0x4] sm:$0xf]
        %v799 = vld [vmem:[#allocation2 + $0x8] sm:$0xf]
        %v800 = vld [vmem:[#allocation2 + $0xc] sm:$0xf]
        %vm801 = vcmask 64512
        %v803 = vsel %vm801, %v793, 0
        %v806 = vsel %vm801, %v797, 0
        %808 = vmatprep.subr.bf16.mxu0 0
        %809 = vmatpush1.bf16.xpose.msra.mxu0 %v806
        %810 = vmatprep.subr.bf16.mxu0 0
        %811 = vmatpush1.bf16.xpose.msra.mxu0 0
        %812 = vmatprep.subr.bf16.mxu0 0
        %813 = vmatpush1.bf16.xpose.msra.mxu0 0
        %814 = vmatprep.subr.bf16.mxu0 0
        %815 = vmatpush1.bf16.xpose.msra.mxu0 0
        %816 = vmatprep.subr.bf16.mxu0 0
        %817 = vmatpush1.bf16.xpose.msra.mxu0 0
        %818 = vmatprep.subr.bf16.mxu0 0
        %819 = vmatpush1.bf16.xpose.msra.mxu0 0
        %820 = vmatprep.subr.bf16.mxu0 0
        %821 = vmatpush1.bf16.xpose.msra.mxu0 0
        %822 = vmatprep.subr.bf16.mxu0 0
        %823 = vmatpush1.bf16.xpose.msra.mxu0 0
        %824 = vmatprep.subr.bf16.mxu0 0
        %825 = vmatpush1.bf16.xpose.msra.mxu0 0
        %826 = vmatprep.subr.bf16.mxu0 0
        %827 = vmatpush1.bf16.xpose.msra.mxu0 0
        %828 = vmatprep.subr.bf16.mxu0 0
        %829 = vmatpush1.bf16.xpose.msra.mxu0 0
        %830 = vmatprep.subr.bf16.mxu0 0
        %831 = vmatpush1.bf16.xpose.msra.mxu0 0
        %832 = vmatprep.subr.bf16.mxu0 0
        %833 = vmatpush1.bf16.xpose.msra.mxu0 0
        %834 = vmatprep.subr.bf16.mxu0 0
        %835 = vmatpush1.bf16.xpose.msra.mxu0 0
        %836 = vmatprep.subr.bf16.mxu0 0
        %837 = vmatpush1.bf16.xpose.msra.mxu0 0
        %838 = vmatprep.subr.bf16.mxu0 0
        %839 = vmatpush1.bf16.xpose.msra.mxu0 0
        %840 = vmatprep.mubr.bf16.mxu0 0
        %841 = vmatmul.mubr.bf16.gmra.mrb[0].mxu0 %v803
        %v842 = vpop.f32.mrb[0].mxu0
        %v843 = vadd.f32 0.0, %v842
        %v844 = vpop.f32.mrb[0].mxu0
        %v845 = vpop.f32.mrb[0].mxu0
        %v846 = vpop.f32.mrb[0].mxu0
        %847 = vdwg.mxu0
        %v849 = vsel %vm801, %v794, 0
        %v852 = vsel %vm801, %v798, 0
        %854 = vmatprep.subr.bf16.mxu0 0
        %855 = vmatpush1.bf16.xpose.msra.mxu0 %v852
        %856 = vmatprep.subr.bf16.mxu0 0
        %857 = vmatpush1.bf16.xpose.msra.mxu0 0
        %858 = vmatprep.subr.bf16.mxu0 0
        %859 = vmatpush1.bf16.xpose.msra.mxu0 0
        %860 = vmatprep.subr.bf16.mxu0 0
        %861 = vmatpush1.bf16.xpose.msra.mxu0 0
        %862 = vmatprep.subr.bf16.mxu0 0
        %863 = vmatpush1.bf16.xpose.msra.mxu0 0
        %864 = vmatprep.subr.bf16.mxu0 0
        %865 = vmatpush1.bf16.xpose.msra.mxu0 0
        %866 = vmatprep.subr.bf16.mxu0 0
        %867 = vmatpush1.bf16.xpose.msra.mxu0 0
        %868 = vmatprep.subr.bf16.mxu0 0
        %869 = vmatpush1.bf16.xpose.msra.mxu0 0
        %870 = vmatprep.subr.bf16.mxu0 0
        %871 = vmatpush1.bf16.xpose.msra.mxu0 0
        %872 = vmatprep.subr.bf16.mxu0 0
        %873 = vmatpush1.bf16.xpose.msra.mxu0 0
        %874 = vmatprep.subr.bf16.mxu0 0
        %875 = vmatpush1.bf16.xpose.msra.mxu0 0
        %876 = vmatprep.subr.bf16.mxu0 0
        %877 = vmatpush1.bf16.xpose.msra.mxu0 0
        %878 = vmatprep.subr.bf16.mxu0 0
        %879 = vmatpush1.bf16.xpose.msra.mxu0 0
        %880 = vmatprep.subr.bf16.mxu0 0
        %881 = vmatpush1.bf16.xpose.msra.mxu0 0
        %882 = vmatprep.subr.bf16.mxu0 0
        %883 = vmatpush1.bf16.xpose.msra.mxu0 0
        %884 = vmatprep.subr.bf16.mxu0 0
        %885 = vmatpush1.bf16.xpose.msra.mxu0 0
        %886 = vmatprep.mubr.bf16.mxu0 0
        %887 = vmatmul.mubr.bf16.gmra.mrb[0].mxu0 %v849
        %v888 = vpop.f32.mrb[0].mxu0
        %v889 = vadd.f32 0.0, %v888
        %v890 = vpop.f32.mrb[0].mxu0
        %v891 = vpop.f32.mrb[0].mxu0
        %v892 = vpop.f32.mrb[0].mxu0
        %893 = vdwg.mxu0
        %v895 = vsel %vm801, %v795, 0
        %v898 = vsel %vm801, %v799, 0
        %900 = vmatprep.subr.bf16.mxu0 0
        %901 = vmatpush1.bf16.xpose.msra.mxu0 %v898
        %902 = vmatprep.subr.bf16.mxu0 0
        %903 = vmatpush1.bf16.xpose.msra.mxu0 0
        %904 = vmatprep.subr.bf16.mxu0 0
        %905 = vmatpush1.bf16.xpose.msra.mxu0 0
        %906 = vmatprep.subr.bf16.mxu0 0
        %907 = vmatpush1.bf16.xpose.msra.mxu0 0
        %908 = vmatprep.subr.bf16.mxu0 0
        %909 = vmatpush1.bf16.xpose.msra.mxu0 0
        %910 = vmatprep.subr.bf16.mxu0 0
        %911 = vmatpush1.bf16.xpose.msra.mxu0 0
        %912 = vmatprep.subr.bf16.mxu0 0
        %913 = vmatpush1.bf16.xpose.msra.mxu0 0
        %914 = vmatprep.subr.bf16.mxu0 0
        %915 = vmatpush1.bf16.xpose.msra.mxu0 0
        %916 = vmatprep.subr.bf16.mxu0 0
        %917 = vmatpush1.bf16.xpose.msra.mxu0 0
        %918 = vmatprep.subr.bf16.mxu0 0
        %919 = vmatpush1.bf16.xpose.msra.mxu0 0
        %920 = vmatprep.subr.bf16.mxu0 0
        %921 = vmatpush1.bf16.xpose.msra.mxu0 0
        %922 = vmatprep.subr.bf16.mxu0 0
        %923 = vmatpush1.bf16.xpose.msra.mxu0 0
        %924 = vmatprep.subr.bf16.mxu0 0
        %925 = vmatpush1.bf16.xpose.msra.mxu0 0
        %926 = vmatprep.subr.bf16.mxu0 0
        %927 = vmatpush1.bf16.xpose.msra.mxu0 0
        %928 = vmatprep.subr.bf16.mxu0 0
        %929 = vmatpush1.bf16.xpose.msra.mxu0 0
        %930 = vmatprep.subr.bf16.mxu0 0
        %931 = vmatpush1.bf16.xpose.msra.mxu0 0
        %932 = vmatprep.mubr.bf16.mxu0 0
        %933 = vmatmul.mubr.bf16.gmra.mrb[0].mxu0 %v895
        %v934 = vpop.f32.mrb[0].mxu0
        %v935 = vadd.f32 0.0, %v934
        %v936 = vpop.f32.mrb[0].mxu0
        %v937 = vpop.f32.mrb[0].mxu0
        %v938 = vpop.f32.mrb[0].mxu0
        %939 = vdwg.mxu0
        %v941 = vsel %vm801, %v796, 0
        %v944 = vsel %vm801, %v800, 0
        %946 = vmatprep.subr.bf16.mxu0 0
        %947 = vmatpush1.bf16.xpose.msra.mxu0 %v944
        %948 = vmatprep.subr.bf16.mxu0 0
        %949 = vmatpush1.bf16.xpose.msra.mxu0 0
        %950 = vmatprep.subr.bf16.mxu0 0
        %951 = vmatpush1.bf16.xpose.msra.mxu0 0
        %952 = vmatprep.subr.bf16.mxu0 0
        %953 = vmatpush1.bf16.xpose.msra.mxu0 0
        %954 = vmatprep.subr.bf16.mxu0 0
        %955 = vmatpush1.bf16.xpose.msra.mxu0 0
        %956 = vmatprep.subr.bf16.mxu0 0
        %957 = vmatpush1.bf16.xpose.msra.mxu0 0
        %958 = vmatprep.subr.bf16.mxu0 0
        %959 = vmatpush1.bf16.xpose.msra.mxu0 0
        %960 = vmatprep.subr.bf16.mxu0 0
        %961 = vmatpush1.bf16.xpose.msra.mxu0 0
        %962 = vmatprep.subr.bf16.mxu0 0
        %963 = vmatpush1.bf16.xpose.msra.mxu0 0
        %964 = vmatprep.subr.bf16.mxu0 0
        %965 = vmatpush1.bf16.xpose.msra.mxu0 0
        %966 = vmatprep.subr.bf16.mxu0 0
        %967 = vmatpush1.bf16.xpose.msra.mxu0 0
        %968 = vmatprep.subr.bf16.mxu0 0
        %969 = vmatpush1.bf16.xpose.msra.mxu0 0
        %970 = vmatprep.subr.bf16.mxu0 0
        %971 = vmatpush1.bf16.xpose.msra.mxu0 0
        %972 = vmatprep.subr.bf16.mxu0 0
        %973 = vmatpush1.bf16.xpose.msra.mxu0 0
        %974 = vmatprep.subr.bf16.mxu0 0
        %975 = vmatpush1.bf16.xpose.msra.mxu0 0
        %976 = vmatprep.subr.bf16.mxu0 0
        %977 = vmatpush1.bf16.xpose.msra.mxu0 0
        %978 = vmatprep.mubr.bf16.mxu0 0
        %979 = vmatmul.mubr.bf16.gmra.mrb[0].mxu0 %v941
        %v980 = vpop.f32.mrb[0].mxu0
        %v981 = vadd.f32 0.0, %v980
        %v982 = vpop.f32.mrb[0].mxu0
        %v983 = vpop.f32.mrb[0].mxu0
        %v984 = vpop.f32.mrb[0].mxu0
        %985 = vdwg.mxu0
        %v986 = vsel %vm801, %v843, -inf
        %987 = vmax.xlane.f32.xlu0 %v986
        %v988 = vpop.xlane.xlu0 %987
        %v989 = vsel %vm801, %v889, -inf
        %990 = vmax.xlane.f32.xlu0 %v989
        %v991 = vpop.xlane.xlu0 %990
        %v992 = vsel %vm801, %v935, -inf
        %993 = vmax.xlane.f32.xlu0 %v992
        %v994 = vpop.xlane.xlu0 %993
        %v995 = vsel %vm801, %v981, -inf
        %996 = vmax.xlane.f32.xlu0 %v995
        %v997 = vpop.xlane.xlu0 %996
        %v998 = vsub.f32 %v843, %v988
        %v999 = vsub.f32 %v889, %v991
        %v1000 = vsub.f32 %v935, %v994
        %v1001 = vsub.f32 %v981, %v997
        %v1002 = vmul.f32 %v998, 1.442695
        %v1003 = vpow.pop %v1002
        %v1004 = vmul.f32 %v999, 1.442695
        %v1005 = vpow.pop %v1004
        %v1006 = vmul.f32 %v1000, 1.442695
        %v1007 = vpow.pop %v1006
        %v1008 = vmul.f32 %v1001, 1.442695
        %v1009 = vpow.pop %v1008
        %v1010 = vsel %vm801, %v1003, 0.0
        %1011 = vadd.xlane.f32.xlu0 %v1010
        %v1012 = vpop.xlane.xlu0 %1011
        %v1013 = vsel %vm801, %v1005, 0.0
        %1014 = vadd.xlane.f32.xlu0 %v1013
        %v1015 = vpop.xlane.xlu0 %1014
        %v1016 = vsel %vm801, %v1007, 0.0
        %1017 = vadd.xlane.f32.xlu0 %v1016
        %v1018 = vpop.xlane.xlu0 %1017
        %v1019 = vsel %vm801, %v1009, 0.0
        %1020 = vadd.xlane.f32.xlu0 %v1019
        %v1021 = vpop.xlane.xlu0 %1020
        %v1022 = vpack.c.bf16 %v1003, %v1003
        %v1023 = vpack.c.bf16 %v1005, %v1005
        %v1024 = vpack.c.bf16 %v1007, %v1007
        %v1025 = vpack.c.bf16 %v1009, %v1009
        %v1026 = vld [vmem:[#allocation3] sm:$0xf]
        %v1027 = vld [vmem:[#allocation3 + $0x4] sm:$0xf]
        %v1028 = vld [vmem:[#allocation3 + $0x8] sm:$0xf]
        %v1029 = vld [vmem:[#allocation3 + $0xc] sm:$0xf]
        %v1031 = vsel %vm801, %v1022, 0
        %vm1033 = vcmask 1043456
        %v1035 = vsel %vm1033, %v1026, 0
        %1037 = vmatprep.subr.bf16.mxu0 0
        %1038 = vmatpush1.bf16.msra.mxu0 %v1035
        %1039 = vmatprep.subr.bf16.mxu0 0
        %1040 = vmatpush1.bf16.msra.mxu0 0
        %1041 = vmatprep.subr.bf16.mxu0 0
        %1042 = vmatpush1.bf16.msra.mxu0 0
        %1043 = vmatprep.subr.bf16.mxu0 0
        %1044 = vmatpush1.bf16.msra.mxu0 0
        %1045 = vmatprep.subr.bf16.mxu0 0
        %1046 = vmatpush1.bf16.msra.mxu0 0
        %1047 = vmatprep.subr.bf16.mxu0 0
        %1048 = vmatpush1.bf16.msra.mxu0 0
        %1049 = vmatprep.subr.bf16.mxu0 0
        %1050 = vmatpush1.bf16.msra.mxu0 0
        %1051 = vmatprep.subr.bf16.mxu0 0
        %1052 = vmatpush1.bf16.msra.mxu0 0
        %1053 = vmatprep.subr.bf16.mxu0 0
        %1054 = vmatpush1.bf16.msra.mxu0 0
        %1055 = vmatprep.subr.bf16.mxu0 0
        %1056 = vmatpush1.bf16.msra.mxu0 0
        %1057 = vmatprep.subr.bf16.mxu0 0
        %1058 = vmatpush1.bf16.msra.mxu0 0
        %1059 = vmatprep.subr.bf16.mxu0 0
        %1060 = vmatpush1.bf16.msra.mxu0 0
        %1061 = vmatprep.subr.bf16.mxu0 0
        %1062 = vmatpush1.bf16.msra.mxu0 0
        %1063 = vmatprep.subr.bf16.mxu0 0
        %1064 = vmatpush1.bf16.msra.mxu0 0
        %1065 = vmatprep.subr.bf16.mxu0 0
        %1066 = vmatpush1.bf16.msra.mxu0 0
        %1067 = vmatprep.subr.bf16.mxu0 0
        %1068 = vmatpush1.bf16.msra.mxu0 0
        %1069 = vmatprep.mubr.bf16.mxu0 0
        %1070 = vmatmul.mubr.bf16.gmra.mrb[0].mxu0 %v1031
        %v1071 = vpop.f32.mrb[0].mxu0
        %v1072 = vadd.f32 0.0, %v1071
        %v1073 = vpop.f32.mrb[0].mxu0
        %v1074 = vpop.f32.mrb[0].mxu0
        %v1075 = vpop.f32.mrb[0].mxu0
        %1076 = vdwg.mxu0
        %v1078 = vsel %vm801, %v1023, 0
        %v1081 = vsel %vm1033, %v1027, 0
        %1083 = vmatprep.subr.bf16.mxu0 0
        %1084 = vmatpush1.bf16.msra.mxu0 %v1081
        %1085 = vmatprep.subr.bf16.mxu0 0
        %1086 = vmatpush1.bf16.msra.mxu0 0
        %1087 = vmatprep.subr.bf16.mxu0 0
        %1088 = vmatpush1.bf16.msra.mxu0 0
        %1089 = vmatprep.subr.bf16.mxu0 0
        %1090 = vmatpush1.bf16.msra.mxu0 0
        %1091 = vmatprep.subr.bf16.mxu0 0
        %1092 = vmatpush1.bf16.msra.mxu0 0
        %1093 = vmatprep.subr.bf16.mxu0 0
        %1094 = vmatpush1.bf16.msra.mxu0 0
        %1095 = vmatprep.subr.bf16.mxu0 0
        %1096 = vmatpush1.bf16.msra.mxu0 0
        %1097 = vmatprep.subr.bf16.mxu0 0
        %1098 = vmatpush1.bf16.msra.mxu0 0
        %1099 = vmatprep.subr.bf16.mxu0 0
        %1100 = vmatpush1.bf16.msra.mxu0 0
        %1101 = vmatprep.subr.bf16.mxu0 0
        %1102 = vmatpush1.bf16.msra.mxu0 0
        %1103 = vmatprep.subr.bf16.mxu0 0
        %1104 = vmatpush1.bf16.msra.mxu0 0
        %1105 = vmatprep.subr.bf16.mxu0 0
        %1106 = vmatpush1.bf16.msra.mxu0 0
        %1107 = vmatprep.subr.bf16.mxu0 0
        %1108 = vmatpush1.bf16.msra.mxu0 0
        %1109 = vmatprep.subr.bf16.mxu0 0
        %1110 = vmatpush1.bf16.msra.mxu0 0
        %1111 = vmatprep.subr.bf16.mxu0 0
        %1112 = vmatpush1.bf16.msra.mxu0 0
        %1113 = vmatprep.subr.bf16.mxu0 0
        %1114 = vmatpush1.bf16.msra.mxu0 0
        %1115 = vmatprep.mubr.bf16.mxu0 0
        %1116 = vmatmul.mubr.bf16.gmra.mrb[0].mxu0 %v1078
        %v1117 = vpop.f32.mrb[0].mxu0
        %v1118 = vadd.f32 0.0, %v1117
        %v1119 = vpop.f32.mrb[0].mxu0
        %v1120 = vpop.f32.mrb[0].mxu0
        %v1121 = vpop.f32.mrb[0].mxu0
        %1122 = vdwg.mxu0
        %v1124 = vsel %vm801, %v1024, 0
        %v1127 = vsel %vm1033, %v1028, 0
        %1129 = vmatprep.subr.bf16.mxu0 0
        %1130 = vmatpush1.bf16.msra.mxu0 %v1127
        %1131 = vmatprep.subr.bf16.mxu0 0
        %1132 = vmatpush1.bf16.msra.mxu0 0
        %1133 = vmatprep.subr.bf16.mxu0 0
        %1134 = vmatpush1.bf16.msra.mxu0 0
        %1135 = vmatprep.subr.bf16.mxu0 0
        %1136 = vmatpush1.bf16.msra.mxu0 0
        %1137 = vmatprep.subr.bf16.mxu0 0
        %1138 = vmatpush1.bf16.msra.mxu0 0
        %1139 = vmatprep.subr.bf16.mxu0 0
        %1140 = vmatpush1.bf16.msra.mxu0 0
        %1141 = vmatprep.subr.bf16.mxu0 0
        %1142 = vmatpush1.bf16.msra.mxu0 0
        %1143 = vmatprep.subr.bf16.mxu0 0
        %1144 = vmatpush1.bf16.msra.mxu0 0
        %1145 = vmatprep.subr.bf16.mxu0 0
        %1146 = vmatpush1.bf16.msra.mxu0 0
        %1147 = vmatprep.subr.bf16.mxu0 0
        %1148 = vmatpush1.bf16.msra.mxu0 0
        %1149 = vmatprep.subr.bf16.mxu0 0
        %1150 = vmatpush1.bf16.msra.mxu0 0
        %1151 = vmatprep.subr.bf16.mxu0 0
        %1152 = vmatpush1.bf16.msra.mxu0 0
        %1153 = vmatprep.subr.bf16.mxu0 0
        %1154 = vmatpush1.bf16.msra.mxu0 0
        %1155 = vmatprep.subr.bf16.mxu0 0
        %1156 = vmatpush1.bf16.msra.mxu0 0
        %1157 = vmatprep.subr.bf16.mxu0 0
        %1158 = vmatpush1.bf16.msra.mxu0 0
        %1159 = vmatprep.subr.bf16.mxu0 0
        %1160 = vmatpush1.bf16.msra.mxu0 0
        %1161 = vmatprep.mubr.bf16.mxu0 0
        %1162 = vmatmul.mubr.bf16.gmra.mrb[0].mxu0 %v1124
        %v1163 = vpop.f32.mrb[0].mxu0
        %v1164 = vadd.f32 0.0, %v1163
        %v1165 = vpop.f32.mrb[0].mxu0
        %v1166 = vpop.f32.mrb[0].mxu0
        %v1167 = vpop.f32.mrb[0].mxu0
        %1168 = vdwg.mxu0
        %v1170 = vsel %vm801, %v1025, 0
        %v1173 = vsel %vm1033, %v1029, 0
        %1175 = vmatprep.subr.bf16.mxu0 0
        %1176 = vmatpush1.bf16.msra.mxu0 %v1173
        %1177 = vmatprep.subr.bf16.mxu0 0
        %1178 = vmatpush1.bf16.msra.mxu0 0
        %1179 = vmatprep.subr.bf16.mxu0 0
        %1180 = vmatpush1.bf16.msra.mxu0 0
        %1181 = vmatprep.subr.bf16.mxu0 0
        %1182 = vmatpush1.bf16.msra.mxu0 0
        %1183 = vmatprep.subr.bf16.mxu0 0
        %1184 = vmatpush1.bf16.msra.mxu0 0
        %1185 = vmatprep.subr.bf16.mxu0 0
        %1186 = vmatpush1.bf16.msra.mxu0 0
        %1187 = vmatprep.subr.bf16.mxu0 0
        %1188 = vmatpush1.bf16.msra.mxu0 0
        %1189 = vmatprep.subr.bf16.mxu0 0
        %1190 = vmatpush1.bf16.msra.mxu0 0
        %1191 = vmatprep.subr.bf16.mxu0 0
        %1192 = vmatpush1.bf16.msra.mxu0 0
        %1193 = vmatprep.subr.bf16.mxu0 0
        %1194 = vmatpush1.bf16.msra.mxu0 0
        %1195 = vmatprep.subr.bf16.mxu0 0
        %1196 = vmatpush1.bf16.msra.mxu0 0
        %1197 = vmatprep.subr.bf16.mxu0 0
        %1198 = vmatpush1.bf16.msra.mxu0 0
        %1199 = vmatprep.subr.bf16.mxu0 0
        %1200 = vmatpush1.bf16.msra.mxu0 0
        %1201 = vmatprep.subr.bf16.mxu0 0
        %1202 = vmatpush1.bf16.msra.mxu0 0
        %1203 = vmatprep.subr.bf16.mxu0 0
        %1204 = vmatpush1.bf16.msra.mxu0 0
        %1205 = vmatprep.subr.bf16.mxu0 0
        %1206 = vmatpush1.bf16.msra.mxu0 0
        %1207 = vmatprep.mubr.bf16.mxu0 0
        %1208 = vmatmul.mubr.bf16.gmra.mrb[0].mxu0 %v1170
        %v1209 = vpop.f32.mrb[0].mxu0
        %v1210 = vadd.f32 0.0, %v1209
        %v1211 = vpop.f32.mrb[0].mxu0
        %v1212 = vpop.f32.mrb[0].mxu0
        %v1213 = vpop.f32.mrb[0].mxu0
        %1214 = vdwg.mxu0
        %v1215 = vrcp.pop %v1012
        %v1216 = vrcp.pop %v1015
        %v1217 = vrcp.pop %v1018
        %v1218 = vrcp.pop %v1021
        %v1219 = vmul.f32 %v1072, %v1215
        %v1220 = vmul.f32 %v1118, %v1216
        %v1221 = vmul.f32 %v1164, %v1217
        %v1222 = vmul.f32 %v1210, %v1218
        %1224 = vrot.lane.b32.xlu0 %v1220, 8
        %v1225 = vpop.permute.xlu0 %1224
        %1228 = vrot.lane.b32.xlu0 %v1221, 16
        %v1229 = vpop.permute.xlu0 %1228
        %1232 = vrot.lane.b32.xlu0 %v1222, 24
        %v1233 = vpop.permute.xlu0 %1232
        %v1235 = vsel %vm801, %v1219, %v1225
        %vm1236 = vcmask 130048
        %v1237 = vsel %vm1236, %v1235, %v1229
        %vm1238 = vcmask 195584
        %v1239 = vsel %vm1238, %v1237, %v1233
        %v1240 = vpack.c.bf16 %v1239, %v1239
        %v1241 = vld [vmem:[#allocation13] sm:$0xf]
        %v1242 = vld [vmem:[#allocation13 + $0x4] sm:$0xf]
        %v1243 = vld [vmem:[#allocation13 + $0x8] sm:$0xf]
        %v1244 = vld [vmem:[#allocation13 + $0xc] sm:$0xf]
        %v1245 = vld [vmem:[%s10] sm:$0x1]
        %v1247 = vlaneseq
        %v1248 = vshrl.u32 %v1247, 7
        %v1249 = vsub.s32 0, %v1248
        %v1250 = vrot.slane %v1245, %v1249
        %v1256 = vunpack.c.l.b16 %v1241
        %v1257 = vunpack.c.l.b16 %v1242
        %v1258 = vunpack.c.l.b16 %v1243
        %v1259 = vunpack.c.l.b16 %v1244
        %v1260 = vpack.c.b16 %v1257, %v1256
        %v1261 = vpack.c.b16 %v1259, %v1258
        %v1265 = vsel %vm739, %v1240, 0
        %1267 = vmatprep.subr.bf16.mxu0 0
        %1268 = vmatpush1.bf16.msra.mxu0 %v1260
        %1269 = vmatprep.subr.bf16.mxu0 0
        %1270 = vmatpush1.bf16.msra.mxu0 %v1261
        %1271 = vmatprep.subr.bf16.mxu0 0
        %1272 = vmatpush1.bf16.msra.mxu0 0
        %1273 = vmatprep.subr.bf16.mxu0 0
        %1274 = vmatpush1.bf16.msra.mxu0 0
        %1275 = vmatprep.subr.bf16.mxu0 0
        %1276 = vmatpush1.bf16.msra.mxu0 0
        %1277 = vmatprep.subr.bf16.mxu0 0
        %1278 = vmatpush1.bf16.msra.mxu0 0
        %1279 = vmatprep.subr.bf16.mxu0 0
        %1280 = vmatpush1.bf16.msra.mxu0 0
        %1281 = vmatprep.subr.bf16.mxu0 0
        %1282 = vmatpush1.bf16.msra.mxu0 0
        %1283 = vmatprep.subr.bf16.mxu0 0
        %1284 = vmatpush1.bf16.msra.mxu0 0
        %1285 = vmatprep.subr.bf16.mxu0 0
        %1286 = vmatpush1.bf16.msra.mxu0 0
        %1287 = vmatprep.subr.bf16.mxu0 0
        %1288 = vmatpush1.bf16.msra.mxu0 0
        %1289 = vmatprep.subr.bf16.mxu0 0
        %1290 = vmatpush1.bf16.msra.mxu0 0
        %1291 = vmatprep.subr.bf16.mxu0 0
        %1292 = vmatpush1.bf16.msra.mxu0 0
        %1293 = vmatprep.subr.bf16.mxu0 0
        %1294 = vmatpush1.bf16.msra.mxu0 0
        %1295 = vmatprep.subr.bf16.mxu0 0
        %1296 = vmatpush1.bf16.msra.mxu0 0
        %1297 = vmatprep.subr.bf16.mxu0 0
        %1298 = vmatpush1.bf16.msra.mxu0 0
        %1299 = vmatprep.mubr.bf16.mxu0 0
        %1300 = vmatmul.mubr.bf16.gmra.mrb[0].mxu0 %v1265
        %v1301 = vpop.f32.mrb[0].mxu0
        %v1302 = vadd.f32 %v1250, %v1301
        %v1303 = vpop.f32.mrb[0].mxu0
        %v1304 = vpop.f32.mrb[0].mxu0
        %v1305 = vpop.f32.mrb[0].mxu0
        %1306 = vdwg.mxu0
        %1307 = vst.msk [vmem:[%s533] sm:$0xff] %vm739, %v1302
        %s1308 = sand.u32 %s303, 1
        %s1309 = scalar_lea.sflag [#allocation6], %s1308
        %s1310 = sand.u32 %s303, 1
        %s1311 = smul.addr %s1310, 8
        %s1312 = scalar_lea.vmem [#allocation15], %s1311
        // Predicated region
        $region93: #{tpu_custom_call.1} parent=63 // pred_check
          %p1313 = pneg %p313
        $region94: #{tpu_custom_call.1} parent=63 // pred_check_branch
          %1315 = sbr.rel (%p1313) target = $region96
        $region95: #{tpu_custom_call.1} parent=63 // pred_region
          %s1317 = ssub.s32 128, 128
          %1318 = vsyncadd %s1309, %s1317
          %s1319 = sadd.s32 %s38, %s37
          %s1320 = smul.addr %s1319, 128
          %s1321 = scalar_lea.hbm %s11, %s1320
          %s1323 = sshll.u32 %s1312, 4
          %s1324 = int_to_ptr.vmem [resolvable:$true] %s1323
          %1326 = dma.vmem_to_hbm [thread:$0]  %s1324, 128, %s1321, %s1309
        $region96: #{tpu_custom_call.1} parent=63 // pred_fallthru
          _
      $region64: #{tpu_custom_call.1} parent=5 // pred_fallthru
        _
      %p1327 = scmp.le.s32.totalorder 2, %s28
      // Predicated region
      $region97: #{tpu_custom_call.1} parent=5 // pred_check
        %p1328 = pneg %p1327
      $region98: #{tpu_custom_call.1} parent=5 // pred_check_branch
        %1330 = sbr.rel (%p1328) target = $region100
      $region99: #{tpu_custom_call.1} parent=5 // pred_region
        %s1331 = ssub.s32 %s28, 2
        // Predicated region
        $region101: #{tpu_custom_call.1} parent=99 // pred_check
          %p1332 = pneg %p319
        $region102: #{tpu_custom_call.1} parent=99 // pred_check_branch
          %1334 = sbr.rel (%p1332) target = $region104
        $region103: #{tpu_custom_call.1} parent=99 // pred_region
          %s1335 = sand.u32 %s304, 1
          %s1336 = scalar_lea.sflag [#allocation6], %s1335
          %s1337 = sand.u32 %s304, 1
          %s1338 = smul.addr %s1337, 8
          %s1339 = scalar_lea.vmem [#allocation15], %s1338
          %1340 = dma.done %s1336, 128
        $region104: #{tpu_custom_call.1} parent=99 // pred_fallthru
          _
      $region100: #{tpu_custom_call.1} parent=5 // pred_fallthru
        _
    $region6: #{tpu_custom_call.1} parent=1 // loop_footer
      %s32 = sadd.s32 1, %s28
    $region7: #{tpu_custom_call.1} parent=1 // loop_footer_branch
      %27 = sbr.rel target = $region3
    $region8: #{tpu_custom_call.1} parent=1 // loop_exit
      _
    %1341 = vsyncpa [#allocation5], 1
    %s1342 = scalar_lea.sflag [#allocation5], 1
    %1343 = vsyncpa %s1342, 1
    %1344 = vsyncpa [#allocation8], 1
    %s1345 = scalar_lea.sflag [#allocation8], 1
    %1346 = vsyncpa %s1345, 1
    %1347 = vsyncpa [#allocation11], 1
    %1348 = vsyncpa [#allocation14], 1
    %1349 = vsyncpa [#allocation6], 1
    %s1350 = scalar_lea.sflag [#allocation6], 1
    %1351 = vsyncpa %s1350, 1

</llo_original>
